<compile_context>
chip_gen: v6e
topology: v6e:2x2x1
jax: 0.10.0
libtpu: 0.0.40
codegen_flags: <defaults>
</compile_context>

<pallas_src>
import jax
import jax.numpy as jnp
from jax.experimental import pallas as pl
from jax.experimental.pallas import tpu as pltpu


# ---------------------------------------------------------------------------
# Configuration (small, consistent with the module's __init__ kwargs)
# ---------------------------------------------------------------------------
NUM_NODES = 8          # num_nodes
RNN_UNITS = 32         # rnn_units (d)
INPUT_DIM = 1          # input_dim
PRE_K = 3              # pre_k
PRE_V = 2              # pre_v
MAX_DIFFUSION_STEP = 2 # max_diffusion_step
NUM_RNN_LAYERS = 2     # num_rnn_layers
NUM_SUPPORTS = 2       # one support from adj_mx0, one from adj_mx
BATCH = 2
SEQ_LEN = 8            # encoder steps fused into one pallas_call

ND = NUM_NODES * RNN_UNITS     # 256: lane-dense feature width (multiple of 128)
N_IN = NUM_NODES * INPUT_DIM   # 8


def _const_spec(shape):
    """Whole-array block whose index never changes across the time grid.

    Pallas keeps such blocks resident in VMEM for the whole grid: weights are
    DMA'd once; the history output is flushed to HBM only at the end."""
    nd = len(shape)
    return pl.BlockSpec(shape, lambda t, _nd=nd: (0,) * _nd)


# ---------------------------------------------------------------------------
# Fused Pallas kernel: whole 2-layer EncoderModel, one grid step per time step
# ---------------------------------------------------------------------------
def encoder_fused_kernel(x_ref, hx0_ref, gx0_ref, gh0_ref, gcat1_ref, wblk_ref,
                         gb_ref, bflat_ref, rflat_ref, attw_ref,
                         out_ref, hist_ref):
    """hist_ref is the (L, K, B, N*d) history; its block index is constant over
    the time grid, so it persists in VMEM across steps (resident state)."""
    t = pl.program_id(0)
    num_layers, k_hist, _, _ = hist_ref.shape

    @pl.when(t == 0)
    def _():
        hist_ref[...] = hx0_ref[...]          # seed the resident history once

    x_in = x_ref[0]                           # (B, N*input_dim), f32
    out_acc = None
    for layer in range(num_layers):
        h_new = hist_ref[layer, k_hist - 1]   # (B, N*d), newest state
        h_old = hist_ref[layer, k_hist - 2]   # (B, N*d)

        # --- graph diffusion conv: one lane-dense bf16 MXU pass per layer ----
        # (plus one tiny (B,8)x(8,256) f32 pass for the raw input of layer 0).
        if layer == 0:
            hcat = jnp.concatenate([h_new, h_old], axis=-1).astype(jnp.bfloat16)
            conv = jnp.dot(x_in, gx0_ref[...],
                           preferred_element_type=jnp.float32)
            conv = conv + jnp.dot(hcat, gh0_ref[...],
                                  preferred_element_type=jnp.float32)
        else:
            xcat = jnp.concatenate([x_in, h_new, h_old],
                                   axis=-1).astype(jnp.bfloat16)
            conv = jnp.dot(xcat, gcat1_ref[...],
                           preferred_element_type=jnp.float32)
        conv = conv + gb_ref[layer]                               # (1, N*d)
        conv = jnp.where(conv > 0, conv, 0.01 * conv)             # leaky_relu

        # --- attention over the pre_k history (f32, unrolled, attb dropped) --
        attw = attw_ref[layer]                                    # (1, N*d)
        ns = [hist_ref[layer, kk] + rflat_ref[layer, kk]
              for kk in range(k_hist)]                            # K x (B, N*d)
        logits = [jnp.sum(ns[kk] * attw, axis=-1, keepdims=True)
                  for kk in range(k_hist)]                        # K x (B, 1)
        m = logits[0]
        for kk in range(1, k_hist):
            m = jnp.maximum(m, logits[kk])
        es = [jnp.exp(l - m) for l in logits]
        denom = es[0]
        for kk in range(1, k_hist):
            denom = denom + es[kk]
        inv = 1.0 / denom
        att = (es[0] * inv) * ns[0]
        for kk in range(1, k_hist):
            att = att + (es[kk] * inv) * ns[kk]                   # (B, N*d)

        # --- dense projection (block-diagonal W keeps it lane-dense) ---------
        proj = jnp.dot(conv.astype(jnp.bfloat16), wblk_ref[layer],
                       preferred_element_type=jnp.float32)
        output = att + proj + bflat_ref[layer]                    # (B, N*d)

        # --- shift the new state into the resident history (slice stores) ----
        for kk in range(k_hist - 1):
            hist_ref[layer, kk] = hist_ref[layer, kk + 1]
        hist_ref[layer, k_hist - 1] = output

        out_acc = output if layer == 0 else out_acc + output
        x_in = output

    out_ref[0] = out_acc


# ---------------------------------------------------------------------------
# Parameter folding (pure JAX, parameter-only, done once outside the kernel)
# ---------------------------------------------------------------------------
def cheb_supports(sup, max_diffusion_step):
    """Chebyshev-style diffusion matrices: [I, A0, 2A0^2-I, A1, 2A1^2-I, ...]."""
    n = sup.shape[-1]
    eye = jnp.eye(n, dtype=jnp.float32)
    mats = [eye]
    for s in range(sup.shape[0]):
        a = sup[s]
        t0, t1 = eye, a
        mats.append(t1)
        for _ in range(2, max_diffusion_step + 1):
            t2 = 2.0 * (a @ t1) - t0
            mats.append(t2)
            t0, t1 = t1, t2
    return jnp.stack(mats)                       # (n_mat, N, N)


def fold_params(layer_params):
    """Fold supports + graph-conv weights into lane-dense dense operators.

    MXU-feeding operators (graph conv, block-diag W) are cast to bf16; all
    bias/attention parameters stay f32."""
    n, d, k = NUM_NODES, RNN_UNITS, PRE_K
    nd = n * d
    S = cheb_supports(layer_params[0]['sup'], MAX_DIFFUSION_STEP)

    ops, wblk, gb, bflat, rflat, attw = [], [], [], [], [], []
    for layer, p in enumerate(layer_params):
        in_dim_l = INPUT_DIM if layer == 0 else d
        # G[j, c, n_out, e] = sum_m S[m, n_out, j] * gw[m, c, e]
        G = jnp.einsum('mnj,mce->jcne', S, p['gw']).astype(jnp.float32)
        gx = G[:, :in_dim_l].reshape(n * in_dim_l, nd)
        gh = jnp.concatenate(
            [G[:, in_dim_l + v * d: in_dim_l + (v + 1) * d].reshape(nd, nd)
             for v in range(PRE_V)], axis=0)                     # (PRE_V*nd, nd)
        ops.append((gx, gh))
        wblk.append(jnp.kron(jnp.eye(n, dtype=jnp.float32), p['W']))
        gb.append(jnp.tile(p['gb'].reshape(-1), n).reshape(1, nd))
        bflat.append(p['b'].reshape(1, nd))
        rflat.append(p['R'].reshape(k, 1, nd))
        attw.append(p['attw'].reshape(1, nd))

    gx0 = ops[0][0]                                              # (8, nd)  f32 (tiny)
    gh0 = ops[0][1].astype(jnp.bfloat16)                         # (2*nd, nd)
    gcat1 = jnp.concatenate([ops[1][0], ops[1][1]],
                            axis=0).astype(jnp.bfloat16)         # (3*nd, nd)

    return dict(gx0=gx0, gh0=gh0, gcat1=gcat1,
                wblk=jnp.stack(wblk).astype(jnp.bfloat16),
                gb=jnp.stack(gb), bflat=jnp.stack(bflat),
                rflat=jnp.stack(rflat), attw=jnp.stack(attw))


# ---------------------------------------------------------------------------
# Wrappers: fused multi-step encoder + single-step module forward
# ---------------------------------------------------------------------------
def _make_specs(B):
    in_specs = [
        pl.BlockSpec((1, B, N_IN), lambda t: (t, 0, 0)),          # x_seq (per t)
        _const_spec((NUM_RNN_LAYERS, PRE_K, B, ND)),              # hx0 (resident)
        _const_spec((N_IN, ND)),                                  # gx0
        _const_spec((PRE_V * ND, ND)),                            # gh0
        _const_spec(((1 + PRE_V) * ND, ND)),                      # gcat1
        _const_spec((NUM_RNN_LAYERS, ND, ND)),                    # wblk
        _const_spec((NUM_RNN_LAYERS, 1, ND)),                     # gb
        _const_spec((NUM_RNN_LAYERS, 1, ND)),                     # bflat
        _const_spec((NUM_RNN_LAYERS, PRE_K, 1, ND)),              # rflat
        _const_spec((NUM_RNN_LAYERS, 1, ND)),                     # attw
    ]
    out_specs = (
        pl.BlockSpec((1, B, ND), lambda t: (t, 0, 0)),            # out_seq (per t)
        _const_spec((NUM_RNN_LAYERS, PRE_K, B, ND)),              # history (resident)
    )
    return in_specs, out_specs


@jax.jit
def encoder_forward_seq(folded, inputs_seq, hx_k):
    """Fused encoder recurrence.

    inputs_seq: (T, B, num_nodes*input_dim)
    hx_k:       (L, B, pre_k, num_nodes, rnn_units)   (module layout)
    returns:    (per-step outputall (T, B, N*d), final hx_k in module layout).
    """
    T, B = inputs_seq.shape[0], inputs_seq.shape[1]
    L, K = hx_k.shape[0], hx_k.shape[2]
    n, d = NUM_NODES, RNN_UNITS

    # lane-dense, K-major history layout: (L, K, B, N*d)
    hx_ld = hx_k.transpose(0, 2, 1, 3, 4).reshape(L, K, B, ND).astype(jnp.float32)

    in_specs, out_specs = _make_specs(B)
    args = (inputs_seq.astype(jnp.float32), hx_ld,
            folded['gx0'], folded['gh0'], folded['gcat1'], folded['wblk'],
            folded['gb'], folded['bflat'], folded['rflat'], folded['attw'])

    out_seq, hist = pl.pallas_call(
        encoder_fused_kernel,
        grid=(T,),
        in_specs=in_specs,
        out_specs=out_specs,
        out_shape=(jax.ShapeDtypeStruct((T, B, ND), jnp.float32),
                   jax.ShapeDtypeStruct((L, K, B, ND), jnp.float32)),
        compiler_params=pltpu.CompilerParams(
            dimension_semantics=("arbitrary",)),   # sequential recurrence
    )(*args)

    new_hx = hist.reshape(L, K, B, n, d).transpose(0, 2, 1, 3, 4)
    return out_seq, new_hx


def encoder_forward(folded, inputs, hx_k):
    """Single-step EncoderModel.forward (exact module semantics)."""
    out_seq, new_hx = encoder_forward_seq(folded, inputs[None], hx_k)
    return out_seq[0], new_hx


# ---------------------------------------------------------------------------
# Pure-JAX f32 reference of the same (unfused) cell math, for numerical sanity
# ---------------------------------------------------------------------------
def _ref_cell(p, inputs_flat, hxk):
    bsz = inputs_flat.shape[0]
    n, d = NUM_NODES, RNN_UNITS
    x_in = inputs_flat.reshape(bsz, n, -1)
    preh = hxk[:, -1:]
    for i in range(1, PRE_V):
        preh = jnp.concatenate([preh, hxk[:, -(i + 1):-i]], axis=-1)
    preh = preh.reshape(bsz, n, d * PRE_V)
    x = jnp.concatenate([x_in, preh], axis=-1).astype(jnp.float32)

    sup = p['sup']
    terms = [x]
    for s in range(sup.shape[0]):
        a = sup[s]
        t0 = x
        t1 = jnp.einsum('ij,bjc->bic', a, t0)
        terms.append(t1)
        for _ in range(2, MAX_DIFFUSION_STEP + 1):
            t2 = 2.0 * jnp.einsum('ij,bjc->bic', a, t1) - t0
            terms.append(t2)
            t0, t1 = t1, t2

    conv = sum(jnp.einsum('bnc,cd->bnd', terms[m], p['gw'][m])
               for m in range(len(terms)))
    conv = conv + p['gb']
    conv = jnp.where(conv > 0, conv, 0.01 * conv)

    new_states = hxk + p['R'][None]
    logits = jnp.sum(new_states * p['attw'][None, None], axis=(2, 3))
    w_att = jax.nn.softmax(logits, axis=1)
    att = jnp.sum(new_states * w_att[:, :, None, None], axis=1)

    proj = jnp.einsum('bnd,de->bne', conv, p['W'])
    out = att + proj + p['b'][None]
    new_hxk = jnp.concatenate([hxk[:, 1:], out[:, None]], axis=1)
    return out.reshape(bsz, n * d), new_hxk


def ref_encoder_forward(layer_params, inputs, hx_k):
    hx_ks = []
    output = inputs
    outputall = None
    for layer_num in range(NUM_RNN_LAYERS):
        o, nh = _ref_cell(layer_params[layer_num], output, hx_k[layer_num])
        hx_ks.append(nh)
        output = o
        outputall = o if layer_num == 0 else outputall + o
    return outputall, jnp.stack(hx_ks)


def ref_encoder_forward_seq(layer_params, inputs_seq, hx_k):
    outs, hx = [], hx_k
    for t in range(inputs_seq.shape[0]):
        o, hx = ref_encoder_forward(layer_params, inputs_seq[t], hx)
        outs.append(o)
    return jnp.stack(outs), hx


# ---------------------------------------------------------------------------
# Deterministic parameter construction (PyTorch-module-style params)
# ---------------------------------------------------------------------------
def make_params(key):
    n, d = NUM_NODES, RNN_UNITS
    n_mat = NUM_SUPPORTS * MAX_DIFFUSION_STEP + 1
    scale = 0.05

    key, k_a0, k_a1 = jax.random.split(key, 3)
    adj0 = jax.random.uniform(k_a0, (n, n)) + jnp.eye(n)
    adj1 = jax.random.uniform(k_a1, (n, n)) + jnp.eye(n)
    sup = jnp.stack([adj0 / jnp.sum(adj0, axis=1, keepdims=True),
                     adj1 / jnp.sum(adj1, axis=1, keepdims=True)],
                    axis=0).astype(jnp.float32)

    layer_params = []
    for layer in range(NUM_RNN_LAYERS):
        in_dim_l = INPUT_DIM if layer == 0 else d
        c = in_dim_l + d * PRE_V
        key, kg, kw, kb, kr, ka = jax.random.split(key, 6)
        layer_params.append(dict(
            sup=sup,
            gw=(scale * jax.random.normal(kg, (n_mat, c, d))).astype(jnp.float32),
            gb=jnp.ones((1, d), jnp.float32),                 # bias_start = 1.0
            W=(scale * jax.random.normal(kw, (d, d))).astype(jnp.float32),
            b=(scale * jax.random.normal(kb, (n, d))).astype(jnp.float32),
            R=(scale * jax.random.normal(kr, (PRE_K, n, d))).astype(jnp.float32),
            attw=(scale * jax.random.normal(ka, (n, d))).astype(jnp.float32),
        ))
    return layer_params


if __name__ == "__main__":
    key = jax.random.PRNGKey(0)
    layer_params = make_params(key)
    folded = fold_params(layer_params)

    key, k_in, k_hx = jax.random.split(key, 3)
    inputs_seq = jax.random.normal(
        k_in, (SEQ_LEN, BATCH, NUM_NODES * INPUT_DIM), dtype=jnp.float32)
    hx_k = jax.random.normal(
        k_hx, (NUM_RNN_LAYERS, BATCH, PRE_K, NUM_NODES, RNN_UNITS),
        dtype=jnp.float32)

    # fused multi-step call: weights stay VMEM-resident for the whole sequence
    out_seq, new_hx = encoder_forward_seq(folded, inputs_seq, hx_k)
    jax.block_until_ready((out_seq, new_hx))

    assert out_seq.shape == (SEQ_LEN, BATCH, NUM_NODES * RNN_UNITS)
    assert new_hx.shape == (NUM_RNN_LAYERS, BATCH, PRE_K, NUM_NODES, RNN_UNITS)

    # single-step call == EncoderModel.forward semantics, checked elementwise
    out_1, hx_1 = encoder_forward(folded, inputs_seq[0], hx_k)
    ref_1, ref_hx_1 = ref_encoder_forward(layer_params, inputs_seq[0], hx_k)
    assert jnp.allclose(out_1, ref_1, rtol=2e-2, atol=2e-2)
    assert jnp.allclose(hx_1, ref_hx_1, rtol=2e-2, atol=2e-2)

    # full-sequence check vs. the f32 unfused reference (bf16 weights +
    # 8 recurrent steps -> norm-based relative error, robust to tail elements)
    ref_seq, ref_hx = ref_encoder_forward_seq(layer_params, inputs_seq, hx_k)

    def _rel(a, b):
        return float(jnp.linalg.norm(a - b) / (jnp.linalg.norm(b) + 1e-6))

    assert _rel(out_seq, ref_seq) < 5e-2
    assert _rel(new_hx, ref_hx) < 5e-2

    print("KERNEL_OK")
</pallas_src>

<mosaic_0001>
module attributes {stable_mosaic.version = 11 : i64} {
  func.func @encoder_fused_kernel(%arg0: i32, %arg1: memref<1x2x8xf32, #tpu.memory_space<vmem>>, %arg2: memref<2x3x2x256xf32, #tpu.memory_space<vmem>>, %arg3: memref<8x256xf32, #tpu.memory_space<vmem>>, %arg4: memref<512x256xbf16, #tpu.memory_space<vmem>>, %arg5: memref<768x256xbf16, #tpu.memory_space<vmem>>, %arg6: memref<2x256x256xbf16, #tpu.memory_space<vmem>>, %arg7: memref<2x1x256xf32, #tpu.memory_space<vmem>>, %arg8: memref<2x1x256xf32, #tpu.memory_space<vmem>>, %arg9: memref<2x3x1x256xf32, #tpu.memory_space<vmem>>, %arg10: memref<2x1x256xf32, #tpu.memory_space<vmem>>, %arg11: memref<1x2x256xf32, #tpu.memory_space<vmem>>, %arg12: memref<2x3x2x256xf32, #tpu.memory_space<vmem>>) attributes {dimension_semantics = [#tpu.dimension_semantics<arbitrary>], iteration_bounds = array<i64: 8>, scalar_prefetch = 0 : i64, scratch_operands = 0 : i64, tpu.core_type = #tpu.core_type<tc>, window_params = [{transform_indices = @transform_0, window_bounds = array<i64: 1, 2, 8>}, {pipeline_mode = #tpu.pipeline_mode<synchronous>, transform_indices = @transform_1, window_bounds = array<i64: 2, 3, 2, 256>}, {pipeline_mode = #tpu.pipeline_mode<synchronous>, transform_indices = @transform_2, window_bounds = array<i64: 8, 256>}, {pipeline_mode = #tpu.pipeline_mode<synchronous>, transform_indices = @transform_3, window_bounds = array<i64: 512, 256>}, {pipeline_mode = #tpu.pipeline_mode<synchronous>, transform_indices = @transform_4, window_bounds = array<i64: 768, 256>}, {pipeline_mode = #tpu.pipeline_mode<synchronous>, transform_indices = @transform_5, window_bounds = array<i64: 2, 256, 256>}, {pipeline_mode = #tpu.pipeline_mode<synchronous>, transform_indices = @transform_6, window_bounds = array<i64: 2, 1, 256>}, {pipeline_mode = #tpu.pipeline_mode<synchronous>, transform_indices = @transform_7, window_bounds = array<i64: 2, 1, 256>}, {pipeline_mode = #tpu.pipeline_mode<synchronous>, transform_indices = @transform_8, window_bounds = array<i64: 2, 3, 1, 256>}, {pipeline_mode = #tpu.pipeline_mode<synchronous>, transform_indices = @transform_9, window_bounds = array<i64: 2, 1, 256>}, {transform_indices = @transform_10, window_bounds = array<i64: 1, 2, 256>}, {pipeline_mode = #tpu.pipeline_mode<synchronous>, transform_indices = @transform_11, window_bounds = array<i64: 2, 3, 2, 256>}]} {
    %c0_i32 = arith.constant 0 : i32
    %0 = arith.cmpi eq, %arg0, %c0_i32 : i32
    %1 = arith.extui %0 : i1 to i32
    %c0_i32_0 = arith.constant 0 : i32
    %2 = arith.cmpi ne, %1, %c0_i32_0 : i32
    scf.if %2 {
      %c0_154 = arith.constant 0 : index
      %c0_155 = arith.constant 0 : index
      %c0_156 = arith.constant 0 : index
      %c0_157 = arith.constant 0 : index
      %200 = vector.load %arg2[%c0_154, %c0_155, %c0_156, %c0_157] : memref<2x3x2x256xf32, #tpu.memory_space<vmem>>, vector<2x3x2x256xf32>
      %c0_158 = arith.constant 0 : index
      %c0_159 = arith.constant 0 : index
      %c0_160 = arith.constant 0 : index
      %c0_161 = arith.constant 0 : index
      %201 = vector.load %arg12[%c0_158, %c0_159, %c0_160, %c0_161] : memref<2x3x2x256xf32, #tpu.memory_space<vmem>>, vector<2x3x2x256xf32>
      tpu.vector_store %arg12[%c0_158, %c0_159, %c0_160, %c0_161], %200 {strides = array<i32>} : memref<2x3x2x256xf32, #tpu.memory_space<vmem>>, vector<2x3x2x256xf32>,
    } else {
    }
    %c0 = arith.constant 0 : index
    %c0_1 = arith.constant 0 : index
    %c0_2 = arith.constant 0 : index
    %3 = vector.load %arg1[%c0, %c0_1, %c0_2] : memref<1x2x8xf32, #tpu.memory_space<vmem>>, vector<1x2x8xf32>
    %4 = vector.shape_cast %3 : vector<1x2x8xf32> to vector<2x8xf32>
    %c0_3 = arith.constant 0 : index
    %c2 = arith.constant 2 : index
    %c0_4 = arith.constant 0 : index
    %c0_5 = arith.constant 0 : index
    %5 = vector.load %arg12[%c0_3, %c2, %c0_4, %c0_5] : memref<2x3x2x256xf32, #tpu.memory_space<vmem>>, vector<1x1x2x256xf32>
    %6 = vector.shape_cast %5 : vector<1x1x2x256xf32> to vector<2x256xf32>
    %c0_6 = arith.constant 0 : index
    %c1 = arith.constant 1 : index
    %c0_7 = arith.constant 0 : index
    %c0_8 = arith.constant 0 : index
    %7 = vector.load %arg12[%c0_6, %c1, %c0_7, %c0_8] : memref<2x3x2x256xf32, #tpu.memory_space<vmem>>, vector<1x1x2x256xf32>
    %8 = vector.shape_cast %7 : vector<1x1x2x256xf32> to vector<2x256xf32>
    %9 = tpu.concatenate %6, %8 in 1 : vector<2x256xf32>, vector<2x256xf32> -> vector<2x512xf32>
    %10 = arith.truncf %9 : vector<2x512xf32> to vector<2x512xbf16>
    %c0_9 = arith.constant 0 : index
    %c0_10 = arith.constant 0 : index
    %11 = vector.load %arg3[%c0_9, %c0_10] : memref<8x256xf32, #tpu.memory_space<vmem>>, vector<8x256xf32>
    %cst = arith.constant dense<0.000000e+00> : vector<2x256xf32>
    %12 = tpu.matmul %4, %11, %cst {dimension_numbers = #tpu.dot_dimension_numbers<[1], [0], [0], [1], [0, 0, 1, 1], [], []>} : vector<2x8xf32>, vector<8x256xf32>, vector<2x256xf32> -> vector<2x256xf32>
    %c0_11 = arith.constant 0 : index
    %c0_12 = arith.constant 0 : index
    %13 = vector.load %arg4[%c0_11, %c0_12] : memref<512x256xbf16, #tpu.memory_space<vmem>>, vector<512x256xbf16>
    %cst_13 = arith.constant dense<0.000000e+00> : vector<2x256xf32>
    %14 = tpu.matmul %10, %13, %cst_13 {dimension_numbers = #tpu.dot_dimension_numbers<[1], [0], [0], [1], [0, 0, 1, 1], [], []>} : vector<2x512xbf16>, vector<512x256xbf16>, vector<2x256xf32> -> vector<2x256xf32>
    %15 = arith.addf %12, %14 : vector<2x256xf32>
    %c0_14 = arith.constant 0 : index
    %c0_15 = arith.constant 0 : index
    %c0_16 = arith.constant 0 : index
    %16 = vector.load %arg7[%c0_14, %c0_15, %c0_16] : memref<2x1x256xf32, #tpu.memory_space<vmem>>, vector<1x1x256xf32>
    %17 = vector.shape_cast %16 : vector<1x1x256xf32> to vector<1x256xf32>
    %18 = vector.broadcast %17 : vector<1x256xf32> to vector<2x256xf32>
    %19 = arith.addf %15, %18 : vector<2x256xf32>
    %cst_17 = arith.constant 0.000000e+00 : f32
    %20 = vector.broadcast %cst_17 : f32 to vector<2x256xf32>
    %21 = arith.cmpf ogt, %19, %20 : vector<2x256xf32>
    %cst_18 = arith.constant 0.00999999977 : f32
    %22 = vector.broadcast %cst_18 : f32 to vector<2x256xf32>
    %23 = arith.mulf %22, %19 : vector<2x256xf32>
    %24 = arith.select %21, %19, %23 : vector<2x256xi1>, vector<2x256xf32>
    %c0_19 = arith.constant 0 : index
    %c0_20 = arith.constant 0 : index
    %c0_21 = arith.constant 0 : index
    %25 = vector.load %arg10[%c0_19, %c0_20, %c0_21] : memref<2x1x256xf32, #tpu.memory_space<vmem>>, vector<1x1x256xf32>
    %26 = vector.shape_cast %25 : vector<1x1x256xf32> to vector<1x256xf32>
    %c0_22 = arith.constant 0 : index
    %c0_23 = arith.constant 0 : index
    %c0_24 = arith.constant 0 : index
    %c0_25 = arith.constant 0 : index
    %27 = vector.load %arg12[%c0_22, %c0_23, %c0_24, %c0_25] : memref<2x3x2x256xf32, #tpu.memory_space<vmem>>, vector<1x1x2x256xf32>
    %28 = vector.shape_cast %27 : vector<1x1x2x256xf32> to vector<2x256xf32>
    %c0_26 = arith.constant 0 : index
    %c0_27 = arith.constant 0 : index
    %c0_28 = arith.constant 0 : index
    %c0_29 = arith.constant 0 : index
    %29 = vector.load %arg9[%c0_26, %c0_27, %c0_28, %c0_29] : memref<2x3x1x256xf32, #tpu.memory_space<vmem>>, vector<1x1x1x256xf32>
    %30 = vector.shape_cast %29 : vector<1x1x1x256xf32> to vector<1x256xf32>
    %31 = vector.broadcast %30 : vector<1x256xf32> to vector<2x256xf32>
    %32 = arith.addf %28, %31 : vector<2x256xf32>
    %c0_30 = arith.constant 0 : index
    %c1_31 = arith.constant 1 : index
    %c0_32 = arith.constant 0 : index
    %c0_33 = arith.constant 0 : index
    %33 = vector.load %arg12[%c0_30, %c1_31, %c0_32, %c0_33] : memref<2x3x2x256xf32, #tpu.memory_space<vmem>>, vector<1x1x2x256xf32>
    %34 = vector.shape_cast %33 : vector<1x1x2x256xf32> to vector<2x256xf32>
    %c0_34 = arith.constant 0 : index
    %c1_35 = arith.constant 1 : index
    %c0_36 = arith.constant 0 : index
    %c0_37 = arith.constant 0 : index
    %35 = vector.load %arg9[%c0_34, %c1_35, %c0_36, %c0_37] : memref<2x3x1x256xf32, #tpu.memory_space<vmem>>, vector<1x1x1x256xf32>
    %36 = vector.shape_cast %35 : vector<1x1x1x256xf32> to vector<1x256xf32>
    %37 = vector.broadcast %36 : vector<1x256xf32> to vector<2x256xf32>
    %38 = arith.addf %34, %37 : vector<2x256xf32>
    %c0_38 = arith.constant 0 : index
    %c2_39 = arith.constant 2 : index
    %c0_40 = arith.constant 0 : index
    %c0_41 = arith.constant 0 : index
    %39 = vector.load %arg12[%c0_38, %c2_39, %c0_40, %c0_41] : memref<2x3x2x256xf32, #tpu.memory_space<vmem>>, vector<1x1x2x256xf32>
    %40 = vector.shape_cast %39 : vector<1x1x2x256xf32> to vector<2x256xf32>
    %c0_42 = arith.constant 0 : index
    %c2_43 = arith.constant 2 : index
    %c0_44 = arith.constant 0 : index
    %c0_45 = arith.constant 0 : index
    %41 = vector.load %arg9[%c0_42, %c2_43, %c0_44, %c0_45] : memref<2x3x1x256xf32, #tpu.memory_space<vmem>>, vector<1x1x1x256xf32>
    %42 = vector.shape_cast %41 : vector<1x1x1x256xf32> to vector<1x256xf32>
    %43 = vector.broadcast %42 : vector<1x256xf32> to vector<2x256xf32>
    %44 = arith.addf %40, %43 : vector<2x256xf32>
    %45 = vector.broadcast %26 : vector<1x256xf32> to vector<2x256xf32>
    %46 = arith.mulf %32, %45 : vector<2x256xf32>
    %cst_46 = arith.constant dense<0.000000e+00> : vector<2xf32>
    %47 = vector.multi_reduction <add>, %46, %cst_46 [1] : vector<2x256xf32> to vector<2xf32>
    %48 = vector.shape_cast %47 : vector<2xf32> to vector<2x1xf32>
    %49 = vector.broadcast %26 : vector<1x256xf32> to vector<2x256xf32>
    %50 = arith.mulf %38, %49 : vector<2x256xf32>
    %cst_47 = arith.constant dense<0.000000e+00> : vector<2xf32>
    %51 = vector.multi_reduction <add>, %50, %cst_47 [1] : vector<2x256xf32> to vector<2xf32>
    %52 = vector.shape_cast %51 : vector<2xf32> to vector<2x1xf32>
    %53 = vector.broadcast %26 : vector<1x256xf32> to vector<2x256xf32>
    %54 = arith.mulf %44, %53 : vector<2x256xf32>
    %cst_48 = arith.constant dense<0.000000e+00> : vector<2xf32>
    %55 = vector.multi_reduction <add>, %54, %cst_48 [1] : vector<2x256xf32> to vector<2xf32>
    %56 = vector.shape_cast %55 : vector<2xf32> to vector<2x1xf32>
    %57 = arith.maximumf %48, %52 : vector<2x1xf32>
    %58 = arith.maximumf %57, %56 : vector<2x1xf32>
    %59 = arith.subf %48, %58 : vector<2x1xf32>
    %60 = math.exp %59 : vector<2x1xf32>
    %61 = arith.subf %52, %58 : vector<2x1xf32>
    %62 = math.exp %61 : vector<2x1xf32>
    %63 = arith.subf %56, %58 : vector<2x1xf32>
    %64 = math.exp %63 : vector<2x1xf32>
    %65 = arith.addf %60, %62 : vector<2x1xf32>
    %66 = arith.addf %65, %64 : vector<2x1xf32>
    %cst_49 = arith.constant 1.000000e+00 : f32
    %67 = vector.broadcast %cst_49 : f32 to vector<2x1xf32>
    %68 = arith.divf %67, %66 : vector<2x1xf32>
    %69 = arith.mulf %60, %68 : vector<2x1xf32>
    %70 = vector.broadcast %69 : vector<2x1xf32> to vector<2x256xf32>
    %71 = arith.mulf %70, %32 : vector<2x256xf32>
    %72 = arith.mulf %62, %68 : vector<2x1xf32>
    %73 = vector.broadcast %72 : vector<2x1xf32> to vector<2x256xf32>
    %74 = arith.mulf %73, %38 : vector<2x256xf32>
    %75 = arith.addf %71, %74 : vector<2x256xf32>
    %76 = arith.mulf %64, %68 : vector<2x1xf32>
    %77 = vector.broadcast %76 : vector<2x1xf32> to vector<2x256xf32>
    %78 = arith.mulf %77, %44 : vector<2x256xf32>
    %79 = arith.addf %75, %78 : vector<2x256xf32>
    %80 = arith.truncf %24 : vector<2x256xf32> to vector<2x256xbf16>
    %c0_50 = arith.constant 0 : index
    %c0_51 = arith.constant 0 : index
    %c0_52 = arith.constant 0 : index
    %81 = vector.load %arg6[%c0_50, %c0_51, %c0_52] : memref<2x256x256xbf16, #tpu.memory_space<vmem>>, vector<1x256x256xbf16>
    %82 = vector.shape_cast %81 : vector<1x256x256xbf16> to vector<256x256xbf16>
    %cst_53 = arith.constant dense<0.000000e+00> : vector<2x256xf32>
    %83 = tpu.matmul %80, %82, %cst_53 {dimension_numbers = #tpu.dot_dimension_numbers<[1], [0], [0], [1], [0, 0, 1, 1], [], []>} : vector<2x256xbf16>, vector<256x256xbf16>, vector<2x256xf32> -> vector<2x256xf32>
    %84 = arith.addf %79, %83 : vector<2x256xf32>
    %c0_54 = arith.constant 0 : index
    %c0_55 = arith.constant 0 : index
    %c0_56 = arith.constant 0 : index
    %85 = vector.load %arg8[%c0_54, %c0_55, %c0_56] : memref<2x1x256xf32, #tpu.memory_space<vmem>>, vector<1x1x256xf32>
    %86 = vector.shape_cast %85 : vector<1x1x256xf32> to vector<1x256xf32>
    %87 = vector.broadcast %86 : vector<1x256xf32> to vector<2x256xf32>
    %88 = arith.addf %84, %87 : vector<2x256xf32>
    %c0_57 = arith.constant 0 : index
    %c1_58 = arith.constant 1 : index
    %c0_59 = arith.constant 0 : index
    %c0_60 = arith.constant 0 : index
    %89 = vector.load %arg12[%c0_57, %c1_58, %c0_59, %c0_60] : memref<2x3x2x256xf32, #tpu.memory_space<vmem>>, vector<1x1x2x256xf32>
    %90 = vector.shape_cast %89 : vector<1x1x2x256xf32> to vector<2x256xf32>
    %c0_61 = arith.constant 0 : index
    %c0_62 = arith.constant 0 : index
    %c0_63 = arith.constant 0 : index
    %c0_64 = arith.constant 0 : index
    %91 = vector.load %arg12[%c0_61, %c0_62, %c0_63, %c0_64] : memref<2x3x2x256xf32, #tpu.memory_space<vmem>>, vector<1x1x2x256xf32>
    %92 = vector.shape_cast %91 : vector<1x1x2x256xf32> to vector<2x256xf32>
    %93 = vector.shape_cast %90 : vector<2x256xf32> to vector<1x1x2x256xf32>
    tpu.vector_store %arg12[%c0_61, %c0_62, %c0_63, %c0_64], %93 {strides = array<i32>} : memref<2x3x2x256xf32, #tpu.memory_space<vmem>>, vector<1x1x2x256xf32>,
    %c0_65 = arith.constant 0 : index
    %c2_66 = arith.constant 2 : index
    %c0_67 = arith.constant 0 : index
    %c0_68 = arith.constant 0 : index
    %94 = vector.load %arg12[%c0_65, %c2_66, %c0_67, %c0_68] : memref<2x3x2x256xf32, #tpu.memory_space<vmem>>, vector<1x1x2x256xf32>
    %95 = vector.shape_cast %94 : vector<1x1x2x256xf32> to vector<2x256xf32>
    %c0_69 = arith.constant 0 : index
    %c1_70 = arith.constant 1 : index
    %c0_71 = arith.constant 0 : index
    %c0_72 = arith.constant 0 : index
    %96 = vector.load %arg12[%c0_69, %c1_70, %c0_71, %c0_72] : memref<2x3x2x256xf32, #tpu.memory_space<vmem>>, vector<1x1x2x256xf32>
    %97 = vector.shape_cast %96 : vector<1x1x2x256xf32> to vector<2x256xf32>
    %98 = vector.shape_cast %95 : vector<2x256xf32> to vector<1x1x2x256xf32>
    tpu.vector_store %arg12[%c0_69, %c1_70, %c0_71, %c0_72], %98 {strides = array<i32>} : memref<2x3x2x256xf32, #tpu.memory_space<vmem>>, vector<1x1x2x256xf32>,
    %c0_73 = arith.constant 0 : index
    %c2_74 = arith.constant 2 : index
    %c0_75 = arith.constant 0 : index
    %c0_76 = arith.constant 0 : index
    %99 = vector.load %arg12[%c0_73, %c2_74, %c0_75, %c0_76] : memref<2x3x2x256xf32, #tpu.memory_space<vmem>>, vector<1x1x2x256xf32>
    %100 = vector.shape_cast %99 : vector<1x1x2x256xf32> to vector<2x256xf32>
    %101 = vector.shape_cast %88 : vector<2x256xf32> to vector<1x1x2x256xf32>
    tpu.vector_store %arg12[%c0_73, %c2_74, %c0_75, %c0_76], %101 {strides = array<i32>} : memref<2x3x2x256xf32, #tpu.memory_space<vmem>>, vector<1x1x2x256xf32>,
    %c1_77 = arith.constant 1 : index
    %c2_78 = arith.constant 2 : index
    %c0_79 = arith.constant 0 : index
    %c0_80 = arith.constant 0 : index
    %102 = vector.load %arg12[%c1_77, %c2_78, %c0_79, %c0_80] : memref<2x3x2x256xf32, #tpu.memory_space<vmem>>, vector<1x1x2x256xf32>
    %103 = vector.shape_cast %102 : vector<1x1x2x256xf32> to vector<2x256xf32>
    %c1_81 = arith.constant 1 : index
    %c1_82 = arith.constant 1 : index
    %c0_83 = arith.constant 0 : index
    %c0_84 = arith.constant 0 : index
    %104 = vector.load %arg12[%c1_81, %c1_82, %c0_83, %c0_84] : memref<2x3x2x256xf32, #tpu.memory_space<vmem>>, vector<1x1x2x256xf32>
    %105 = vector.shape_cast %104 : vector<1x1x2x256xf32> to vector<2x256xf32>
    %106 = tpu.concatenate %88, %103, %105 in 1 : vector<2x256xf32>, vector<2x256xf32>, vector<2x256xf32> -> vector<2x768xf32>
    %107 = arith.truncf %106 : vector<2x768xf32> to vector<2x768xbf16>
    %c0_85 = arith.constant 0 : index
    %c0_86 = arith.constant 0 : index
    %108 = vector.load %arg5[%c0_85, %c0_86] : memref<768x256xbf16, #tpu.memory_space<vmem>>, vector<768x256xbf16>
    %cst_87 = arith.constant dense<0.000000e+00> : vector<2x256xf32>
    %109 = tpu.matmul %107, %108, %cst_87 {dimension_numbers = #tpu.dot_dimension_numbers<[1], [0], [0], [1], [0, 0, 1, 1], [], []>} : vector<2x768xbf16>, vector<768x256xbf16>, vector<2x256xf32> -> vector<2x256xf32>
    %c1_88 = arith.constant 1 : index
    %c0_89 = arith.constant 0 : index
    %c0_90 = arith.constant 0 : index
    %110 = vector.load %arg7[%c1_88, %c0_89, %c0_90] : memref<2x1x256xf32, #tpu.memory_space<vmem>>, vector<1x1x256xf32>
    %111 = vector.shape_cast %110 : vector<1x1x256xf32> to vector<1x256xf32>
    %112 = vector.broadcast %111 : vector<1x256xf32> to vector<2x256xf32>
    %113 = arith.addf %109, %112 : vector<2x256xf32>
    %cst_91 = arith.constant 0.000000e+00 : f32
    %114 = vector.broadcast %cst_91 : f32 to vector<2x256xf32>
    %115 = arith.cmpf ogt, %113, %114 : vector<2x256xf32>
    %cst_92 = arith.constant 0.00999999977 : f32
    %116 = vector.broadcast %cst_92 : f32 to vector<2x256xf32>
    %117 = arith.mulf %116, %113 : vector<2x256xf32>
    %118 = arith.select %115, %113, %117 : vector<2x256xi1>, vector<2x256xf32>
    %c1_93 = arith.constant 1 : index
    %c0_94 = arith.constant 0 : index
    %c0_95 = arith.constant 0 : index
    %119 = vector.load %arg10[%c1_93, %c0_94, %c0_95] : memref<2x1x256xf32, #tpu.memory_space<vmem>>, vector<1x1x256xf32>
    %120 = vector.shape_cast %119 : vector<1x1x256xf32> to vector<1x256xf32>
    %c1_96 = arith.constant 1 : index
    %c0_97 = arith.constant 0 : index
    %c0_98 = arith.constant 0 : index
    %c0_99 = arith.constant 0 : index
    %121 = vector.load %arg12[%c1_96, %c0_97, %c0_98, %c0_99] : memref<2x3x2x256xf32, #tpu.memory_space<vmem>>, vector<1x1x2x256xf32>
    %122 = vector.shape_cast %121 : vector<1x1x2x256xf32> to vector<2x256xf32>
    %c1_100 = arith.constant 1 : index
    %c0_101 = arith.constant 0 : index
    %c0_102 = arith.constant 0 : index
    %c0_103 = arith.constant 0 : index
    %123 = vector.load %arg9[%c1_100, %c0_101, %c0_102, %c0_103] : memref<2x3x1x256xf32, #tpu.memory_space<vmem>>, vector<1x1x1x256xf32>
    %124 = vector.shape_cast %123 : vector<1x1x1x256xf32> to vector<1x256xf32>
    %125 = vector.broadcast %124 : vector<1x256xf32> to vector<2x256xf32>
    %126 = arith.addf %122, %125 : vector<2x256xf32>
    %c1_104 = arith.constant 1 : index
    %c1_105 = arith.constant 1 : index
    %c0_106 = arith.constant 0 : index
    %c0_107 = arith.constant 0 : index
    %127 = vector.load %arg12[%c1_104, %c1_105, %c0_106, %c0_107] : memref<2x3x2x256xf32, #tpu.memory_space<vmem>>, vector<1x1x2x256xf32>
    %128 = vector.shape_cast %127 : vector<1x1x2x256xf32> to vector<2x256xf32>
    %c1_108 = arith.constant 1 : index
    %c1_109 = arith.constant 1 : index
    %c0_110 = arith.constant 0 : index
    %c0_111 = arith.constant 0 : index
    %129 = vector.load %arg9[%c1_108, %c1_109, %c0_110, %c0_111] : memref<2x3x1x256xf32, #tpu.memory_space<vmem>>, vector<1x1x1x256xf32>
    %130 = vector.shape_cast %129 : vector<1x1x1x256xf32> to vector<1x256xf32>
    %131 = vector.broadcast %130 : vector<1x256xf32> to vector<2x256xf32>
    %132 = arith.addf %128, %131 : vector<2x256xf32>
    %c1_112 = arith.constant 1 : index
    %c2_113 = arith.constant 2 : index
    %c0_114 = arith.constant 0 : index
    %c0_115 = arith.constant 0 : index
    %133 = vector.load %arg12[%c1_112, %c2_113, %c0_114, %c0_115] : memref<2x3x2x256xf32, #tpu.memory_space<vmem>>, vector<1x1x2x256xf32>
    %134 = vector.shape_cast %133 : vector<1x1x2x256xf32> to vector<2x256xf32>
    %c1_116 = arith.constant 1 : index
    %c2_117 = arith.constant 2 : index
    %c0_118 = arith.constant 0 : index
    %c0_119 = arith.constant 0 : index
    %135 = vector.load %arg9[%c1_116, %c2_117, %c0_118, %c0_119] : memref<2x3x1x256xf32, #tpu.memory_space<vmem>>, vector<1x1x1x256xf32>
    %136 = vector.shape_cast %135 : vector<1x1x1x256xf32> to vector<1x256xf32>
    %137 = vector.broadcast %136 : vector<1x256xf32> to vector<2x256xf32>
    %138 = arith.addf %134, %137 : vector<2x256xf32>
    %139 = vector.broadcast %120 : vector<1x256xf32> to vector<2x256xf32>
    %140 = arith.mulf %126, %139 : vector<2x256xf32>
    %cst_120 = arith.constant dense<0.000000e+00> : vector<2xf32>
    %141 = vector.multi_reduction <add>, %140, %cst_120 [1] : vector<2x256xf32> to vector<2xf32>
    %142 = vector.shape_cast %141 : vector<2xf32> to vector<2x1xf32>
    %143 = vector.broadcast %120 : vector<1x256xf32> to vector<2x256xf32>
    %144 = arith.mulf %132, %143 : vector<2x256xf32>
    %cst_121 = arith.constant dense<0.000000e+00> : vector<2xf32>
    %145 = vector.multi_reduction <add>, %144, %cst_121 [1] : vector<2x256xf32> to vector<2xf32>
    %146 = vector.shape_cast %145 : vector<2xf32> to vector<2x1xf32>
    %147 = vector.broadcast %120 : vector<1x256xf32> to vector<2x256xf32>
    %148 = arith.mulf %138, %147 : vector<2x256xf32>
    %cst_122 = arith.constant dense<0.000000e+00> : vector<2xf32>
    %149 = vector.multi_reduction <add>, %148, %cst_122 [1] : vector<2x256xf32> to vector<2xf32>
    %150 = vector.shape_cast %149 : vector<2xf32> to vector<2x1xf32>
    %151 = arith.maximumf %142, %146 : vector<2x1xf32>
    %152 = arith.maximumf %151, %150 : vector<2x1xf32>
    %153 = arith.subf %142, %152 : vector<2x1xf32>
    %154 = math.exp %153 : vector<2x1xf32>
    %155 = arith.subf %146, %152 : vector<2x1xf32>
    %156 = math.exp %155 : vector<2x1xf32>
    %157 = arith.subf %150, %152 : vector<2x1xf32>
    %158 = math.exp %157 : vector<2x1xf32>
    %159 = arith.addf %154, %156 : vector<2x1xf32>
    %160 = arith.addf %159, %158 : vector<2x1xf32>
    %cst_123 = arith.constant 1.000000e+00 : f32
    %161 = vector.broadcast %cst_123 : f32 to vector<2x1xf32>
    %162 = arith.divf %161, %160 : vector<2x1xf32>
    %163 = arith.mulf %154, %162 : vector<2x1xf32>
    %164 = vector.broadcast %163 : vector<2x1xf32> to vector<2x256xf32>
    %165 = arith.mulf %164, %126 : vector<2x256xf32>
    %166 = arith.mulf %156, %162 : vector<2x1xf32>
    %167 = vector.broadcast %166 : vector<2x1xf32> to vector<2x256xf32>
    %168 = arith.mulf %167, %132 : vector<2x256xf32>
    %169 = arith.addf %165, %168 : vector<2x256xf32>
    %170 = arith.mulf %158, %162 : vector<2x1xf32>
    %171 = vector.broadcast %170 : vector<2x1xf32> to vector<2x256xf32>
    %172 = arith.mulf %171, %138 : vector<2x256xf32>
    %173 = arith.addf %169, %172 : vector<2x256xf32>
    %174 = arith.truncf %118 : vector<2x256xf32> to vector<2x256xbf16>
    %c1_124 = arith.constant 1 : index
    %c0_125 = arith.constant 0 : index
    %c0_126 = arith.constant 0 : index
    %175 = vector.load %arg6[%c1_124, %c0_125, %c0_126] : memref<2x256x256xbf16, #tpu.memory_space<vmem>>, vector<1x256x256xbf16>
    %176 = vector.shape_cast %175 : vector<1x256x256xbf16> to vector<256x256xbf16>
    %cst_127 = arith.constant dense<0.000000e+00> : vector<2x256xf32>
    %177 = tpu.matmul %174, %176, %cst_127 {dimension_numbers = #tpu.dot_dimension_numbers<[1], [0], [0], [1], [0, 0, 1, 1], [], []>} : vector<2x256xbf16>, vector<256x256xbf16>, vector<2x256xf32> -> vector<2x256xf32>
    %178 = arith.addf %173, %177 : vector<2x256xf32>
    %c1_128 = arith.constant 1 : index
    %c0_129 = arith.constant 0 : index
    %c0_130 = arith.constant 0 : index
    %179 = vector.load %arg8[%c1_128, %c0_129, %c0_130] : memref<2x1x256xf32, #tpu.memory_space<vmem>>, vector<1x1x256xf32>
    %180 = vector.shape_cast %179 : vector<1x1x256xf32> to vector<1x256xf32>
    %181 = vector.broadcast %180 : vector<1x256xf32> to vector<2x256xf32>
    %182 = arith.addf %178, %181 : vector<2x256xf32>
    %c1_131 = arith.constant 1 : index
    %c1_132 = arith.constant 1 : index
    %c0_133 = arith.constant 0 : index
    %c0_134 = arith.constant 0 : index
    %183 = vector.load %arg12[%c1_131, %c1_132, %c0_133, %c0_134] : memref<2x3x2x256xf32, #tpu.memory_space<vmem>>, vector<1x1x2x256xf32>
    %184 = vector.shape_cast %183 : vector<1x1x2x256xf32> to vector<2x256xf32>
    %c1_135 = arith.constant 1 : index
    %c0_136 = arith.constant 0 : index
    %c0_137 = arith.constant 0 : index
    %c0_138 = arith.constant 0 : index
    %185 = vector.load %arg12[%c1_135, %c0_136, %c0_137, %c0_138] : memref<2x3x2x256xf32, #tpu.memory_space<vmem>>, vector<1x1x2x256xf32>
    %186 = vector.shape_cast %185 : vector<1x1x2x256xf32> to vector<2x256xf32>
    %187 = vector.shape_cast %184 : vector<2x256xf32> to vector<1x1x2x256xf32>
    tpu.vector_store %arg12[%c1_135, %c0_136, %c0_137, %c0_138], %187 {strides = array<i32>} : memref<2x3x2x256xf32, #tpu.memory_space<vmem>>, vector<1x1x2x256xf32>,
    %c1_139 = arith.constant 1 : index
    %c2_140 = arith.constant 2 : index
    %c0_141 = arith.constant 0 : index
    %c0_142 = arith.constant 0 : index
    %188 = vector.load %arg12[%c1_139, %c2_140, %c0_141, %c0_142] : memref<2x3x2x256xf32, #tpu.memory_space<vmem>>, vector<1x1x2x256xf32>
    %189 = vector.shape_cast %188 : vector<1x1x2x256xf32> to vector<2x256xf32>
    %c1_143 = arith.constant 1 : index
    %c1_144 = arith.constant 1 : index
    %c0_145 = arith.constant 0 : index
    %c0_146 = arith.constant 0 : index
    %190 = vector.load %arg12[%c1_143, %c1_144, %c0_145, %c0_146] : memref<2x3x2x256xf32, #tpu.memory_space<vmem>>, vector<1x1x2x256xf32>
    %191 = vector.shape_cast %190 : vector<1x1x2x256xf32> to vector<2x256xf32>
    %192 = vector.shape_cast %189 : vector<2x256xf32> to vector<1x1x2x256xf32>
    tpu.vector_store %arg12[%c1_143, %c1_144, %c0_145, %c0_146], %192 {strides = array<i32>} : memref<2x3x2x256xf32, #tpu.memory_space<vmem>>, vector<1x1x2x256xf32>,
    %c1_147 = arith.constant 1 : index
    %c2_148 = arith.constant 2 : index
    %c0_149 = arith.constant 0 : index
    %c0_150 = arith.constant 0 : index
    %193 = vector.load %arg12[%c1_147, %c2_148, %c0_149, %c0_150] : memref<2x3x2x256xf32, #tpu.memory_space<vmem>>, vector<1x1x2x256xf32>
    %194 = vector.shape_cast %193 : vector<1x1x2x256xf32> to vector<2x256xf32>
    %195 = vector.shape_cast %182 : vector<2x256xf32> to vector<1x1x2x256xf32>
    tpu.vector_store %arg12[%c1_147, %c2_148, %c0_149, %c0_150], %195 {strides = array<i32>} : memref<2x3x2x256xf32, #tpu.memory_space<vmem>>, vector<1x1x2x256xf32>,
    %196 = arith.addf %88, %182 : vector<2x256xf32>
    %c0_151 = arith.constant 0 : index
    %c0_152 = arith.constant 0 : index
    %c0_153 = arith.constant 0 : index
    %197 = vector.load %arg11[%c0_151, %c0_152, %c0_153] : memref<1x2x256xf32, #tpu.memory_space<vmem>>, vector<1x2x256xf32>
    %198 = vector.shape_cast %197 : vector<1x2x256xf32> to vector<2x256xf32>
    %199 = vector.shape_cast %196 : vector<2x256xf32> to vector<1x2x256xf32>
    tpu.vector_store %arg11[%c0_151, %c0_152, %c0_153], %199 {strides = array<i32>} : memref<1x2x256xf32, #tpu.memory_space<vmem>>, vector<1x2x256xf32>,
    return
  }
  func.func @transform_0(%arg0: i32) -> (i32, i32, i32) {
    %c0_i32 = arith.constant 0 : i32
    %c0_i32_0 = arith.constant 0 : i32
    %c0_i32_1 = arith.constant 0 : i32
    return %arg0, %c0_i32, %c0_i32_0 : i32, i32, i32
  }
  func.func @transform_1(%arg0: i32) -> (i32, i32, i32, i32) {
    %c0_i32 = arith.constant 0 : i32
    %c0_i32_0 = arith.constant 0 : i32
    %c0_i32_1 = arith.constant 0 : i32
    %c0_i32_2 = arith.constant 0 : i32
    %c0_i32_3 = arith.constant 0 : i32
    return %c0_i32, %c0_i32_0, %c0_i32_1, %c0_i32_2 : i32, i32, i32, i32
  }
  func.func @transform_2(%arg0: i32) -> (i32, i32) {
    %c0_i32 = arith.constant 0 : i32
    %c0_i32_0 = arith.constant 0 : i32
    %c0_i32_1 = arith.constant 0 : i32
    return %c0_i32, %c0_i32_0 : i32, i32
  }
  func.func @transform_3(%arg0: i32) -> (i32, i32) {
    %c0_i32 = arith.constant 0 : i32
    %c0_i32_0 = arith.constant 0 : i32
    %c0_i32_1 = arith.constant 0 : i32
    return %c0_i32, %c0_i32_0 : i32, i32
  }
  func.func @transform_4(%arg0: i32) -> (i32, i32) {
    %c0_i32 = arith.constant 0 : i32
    %c0_i32_0 = arith.constant 0 : i32
    %c0_i32_1 = arith.constant 0 : i32
    return %c0_i32, %c0_i32_0 : i32, i32
  }
  func.func @transform_5(%arg0: i32) -> (i32, i32, i32) {
    %c0_i32 = arith.constant 0 : i32
    %c0_i32_0 = arith.constant 0 : i32
    %c0_i32_1 = arith.constant 0 : i32
    %c0_i32_2 = arith.constant 0 : i32
    return %c0_i32, %c0_i32_0, %c0_i32_1 : i32, i32, i32
  }
  func.func @transform_6(%arg0: i32) -> (i32, i32, i32) {
    %c0_i32 = arith.constant 0 : i32
    %c0_i32_0 = arith.constant 0 : i32
    %c0_i32_1 = arith.constant 0 : i32
    %c0_i32_2 = arith.constant 0 : i32
    return %c0_i32, %c0_i32_0, %c0_i32_1 : i32, i32, i32
  }
  func.func @transform_7(%arg0: i32) -> (i32, i32, i32) {
    %c0_i32 = arith.constant 0 : i32
    %c0_i32_0 = arith.constant 0 : i32
    %c0_i32_1 = arith.constant 0 : i32
    %c0_i32_2 = arith.constant 0 : i32
    return %c0_i32, %c0_i32_0, %c0_i32_1 : i32, i32, i32
  }
  func.func @transform_8(%arg0: i32) -> (i32, i32, i32, i32) {
    %c0_i32 = arith.constant 0 : i32
    %c0_i32_0 = arith.constant 0 : i32
    %c0_i32_1 = arith.constant 0 : i32
    %c0_i32_2 = arith.constant 0 : i32
    %c0_i32_3 = arith.constant 0 : i32
    return %c0_i32, %c0_i32_0, %c0_i32_1, %c0_i32_2 : i32, i32, i32, i32
  }
  func.func @transform_9(%arg0: i32) -> (i32, i32, i32) {
    %c0_i32 = arith.constant 0 : i32
    %c0_i32_0 = arith.constant 0 : i32
    %c0_i32_1 = arith.constant 0 : i32
    %c0_i32_2 = arith.constant 0 : i32
    return %c0_i32, %c0_i32_0, %c0_i32_1 : i32, i32, i32
  }
  func.func @transform_10(%arg0: i32) -> (i32, i32, i32) {
    %c0_i32 = arith.constant 0 : i32
    %c0_i32_0 = arith.constant 0 : i32
    %c0_i32_1 = arith.constant 0 : i32
    return %arg0, %c0_i32, %c0_i32_0 : i32, i32, i32
  }
  func.func @transform_11(%arg0: i32) -> (i32, i32, i32, i32) {
    %c0_i32 = arith.constant 0 : i32
    %c0_i32_0 = arith.constant 0 : i32
    %c0_i32_1 = arith.constant 0 : i32
    %c0_i32_2 = arith.constant 0 : i32
    %c0_i32_3 = arith.constant 0 : i32
    return %c0_i32, %c0_i32_0, %c0_i32_1, %c0_i32_2 : i32, i32, i32, i32
  }
}

</mosaic_0001>

<llo_original>
// kernel: encoder_forward_seq.1
$region0: #{encoder_forward_seq.1}
  #allocation0 [shape = 'u32[]', space=smem, size = 0x4, offset = 0x4, fixed_abs, tag = 'smem constant byte address 0x4 - core index']
  #allocation1 [shape = 'u32[144,128]{1,0:T(1,128)}', space=vmem, size = 0x12000, scoped, tag = 'internal scratch']
  %s0 = inlined_call_operand.vmem [shape: f32[8,2,8], index: 0, kind: input, shape index: {}]
  %s1 = inlined_call_operand.vmem [shape: f32[2,3,2,256], index: 1, kind: input, shape index: {}]
  %s2 = inlined_call_operand.vmem [shape: f32[8,256], index: 2, kind: input, shape index: {}]
  %s3 = inlined_call_operand.hbm [shape: bf16[512,256], index: 3, kind: input, shape index: {}]
  %s4 = inlined_call_operand.hbm [shape: bf16[768,256], index: 4, kind: input, shape index: {}]
  %s5 = inlined_call_operand.hbm [shape: bf16[2,256,256], index: 5, kind: input, shape index: {}]
  %s6 = inlined_call_operand.vmem [shape: f32[2,1,256], index: 6, kind: input, shape index: {}]
  %s7 = inlined_call_operand.vmem [shape: f32[2,1,256], index: 7, kind: input, shape index: {}]
  %s8 = inlined_call_operand.vmem [shape: f32[2,3,1,256], index: 8, kind: input, shape index: {}]
  %s9 = inlined_call_operand.vmem [shape: f32[2,1,256], index: 9, kind: input, shape index: {}]
  %s10 = inlined_call_operand.hbm [shape: f32[8,2,256], index: 10, kind: output, shape index: {0}]
  %s11 = inlined_call_operand.vmem [shape: f32[2,3,2,256], index: 11, kind: output, shape index: {1}]
  %12 = xla_tuple %s10, %s11
  %s13 = sld [smem:[#allocation0]]
  $region97: #{encoder_forward_seq.1} parent=0
    _
  %s15 = ssub.s32 1, %s13
  %s16 = scalar_select 0, %s15, %s13
  $region1: #{encoder_forward_seq.1} parent=0
    #allocation2 [shape = 'u8[262144]{0}', space=vmem, size = 0x40000, scoped, tag = 'input window, operand 3, single buffered']
    #allocation3 [shape = 's32[2]{0}', space=sflag, size = 0x8, scoped, tag = 'scoped memory for encoder_forward_seq.1']
    #allocation4 [shape = 's32[2]{0}', space=sflag, size = 0x8, scoped, tag = 'scoped memory for encoder_forward_seq.1']
    #allocation5 [shape = 'u8[393216]{0}', space=vmem, size = 0x60000, scoped, tag = 'input window, operand 4, single buffered']
    #allocation6 [shape = 's32[1]{0}', space=sflag, size = 0x4, scoped, tag = 'scoped memory for encoder_forward_seq.1']
    #allocation7 [shape = 'u8[262144]{0}', space=vmem, size = 0x40000, scoped, tag = 'input window, operand 5, single buffered']
    #allocation8 [shape = 'u8[4096]{0}', space=vmem, size = 0x1000, scoped, tag = 'output window, operand 0']
    %17 = vsyncpa [#allocation3], 0
    %18 = vsyncpa [#allocation6], 0
    %19 = vsyncpa [#allocation4], 0
    %s20 = scalar_lea.sflag [#allocation4], 1
    %21 = vsyncpa %s20, 0
    loop: start=0, step=1, limit=10
    $region2: #{encoder_forward_seq.1} parent=1 // loop_pre_header
      _
    $region3: #{encoder_forward_seq.1} parent=1 // loop_header
      %s23 = sphi 0, %s27
      %p24 = scmp.ge.s32.totalorder %s23, 10
      %s33 = sphi 0, %s35
      %s36 = sphi 0, %s33
      %s37 = sphi 0, %s36
      %s53 = sphi 0, %s37
      %s57 = sphi 0, %s57
      %s59 = sphi 0, %s57
      %s60 = sphi 0, %s59
      %s74 = sphi 0, %s60
      %s78 = sphi 0, %s78
      %s80 = sphi 0, %s78
      %s81 = sphi 0, %s80
      %s95 = sphi 0, %s81
      %s99 = sphi 0, %s99
      %s101 = sphi 0, %s99
      %s102 = sphi 0, %s101
      %s116 = sphi 0, %s102
      %s120 = sphi 0, %s120
      %s122 = sphi 0, %s120
      %s123 = sphi 0, %s122
      %s137 = sphi 0, %s123
      %s141 = sphi 0, %s141
      %s143 = sphi 0, %s141
      %s144 = sphi 0, %s143
      %s158 = sphi 0, %s144
      %s162 = sphi 0, %s162
      %s164 = sphi 0, %s162
      %s165 = sphi 0, %s164
      %s179 = sphi 0, %s165
      %s183 = sphi 0, %s183
      %s185 = sphi 0, %s183
      %s186 = sphi 0, %s185
      %s200 = sphi 0, %s186
      %s204 = sphi 0, %s204
      %s206 = sphi 0, %s204
      %s207 = sphi 0, %s206
      %s221 = sphi 0, %s207
      %s225 = sphi 0, %s225
      %s227 = sphi 0, %s225
      %s228 = sphi 0, %s227
      %s242 = sphi 0, %s228
      %s248 = sphi 0, %s250
      %s251 = sphi 0, %s248
      %s252 = sphi 0, %s251
      %s268 = sphi 0, %s252
      %s272 = sphi 0, %s272
      %s274 = sphi 0, %s272
      %s275 = sphi 0, %s274
      %s289 = sphi 0, %s275
    $region4: #{encoder_forward_seq.1} parent=1 // loop_header_branch
      %26 = sbr.rel (%p24) target = $region8
    $region5: #{encoder_forward_seq.1} parent=1 // loop_body
      %s28 = ssub.s32 %s23, 1
      %s29 = ssub.s32 %s23, 2
      %s30 = sadd.s32 %s23, 1
      %s31 = ssub.s32 %s23, %s30
      %p32 = scmp.eq.s32.totalorder %s31, 0
      %s34 = sadd.s32 %s33, 1
      %s35 = scalar_select %p32, %s33, %s34
      %p38 = pneg %p32
      %p39 = scmp.eq.s32.totalorder %s23, 7
      %p40 = por %p38, %p39
      %p41 = scmp.ne.s32.totalorder %s33, %s36
      %p42 = scmp.eq.s32.totalorder %s23, 0
      %p43 = por %p41, %p42
      %p44 = scmp.ne.s32.totalorder %s33, %s36
      %p45 = scmp.eq.s32.totalorder %s28, 7
      %p46 = por %p44, %p45
      %p47 = scmp.ne.s32.totalorder %s36, %s37
      %p48 = scmp.eq.s32.totalorder %s28, 0
      %p49 = por %p47, %p48
      %p50 = scmp.ne.s32.totalorder %s36, %s37
      %p51 = scmp.eq.s32.totalorder %s29, 7
      %p52 = por %p50, %p51
      %p54 = scmp.ne.s32.totalorder %s37, %s53
      %p55 = scmp.eq.s32.totalorder %s29, 0
      %p56 = por %p54, %p55
      %s58 = sadd.s32 %s57, 1
      %p61 = scmp.eq.s32.totalorder %s23, 7
      %p62 = scmp.ne.s32.totalorder %s57, %s59
      %p63 = scmp.eq.s32.totalorder %s23, 0
      %p64 = por %p62, %p63
      %p65 = scmp.ne.s32.totalorder %s57, %s59
      %p66 = scmp.eq.s32.totalorder %s28, 7
      %p67 = por %p65, %p66
      %p68 = scmp.ne.s32.totalorder %s59, %s60
      %p69 = scmp.eq.s32.totalorder %s28, 0
      %p70 = por %p68, %p69
      %p71 = scmp.ne.s32.totalorder %s59, %s60
      %p72 = scmp.eq.s32.totalorder %s29, 7
      %p73 = por %p71, %p72
      %p75 = scmp.ne.s32.totalorder %s60, %s74
      %p76 = scmp.eq.s32.totalorder %s29, 0
      %p77 = por %p75, %p76
      %s79 = sadd.s32 %s78, 1
      %p82 = scmp.eq.s32.totalorder %s23, 7
      %p83 = scmp.ne.s32.totalorder %s78, %s80
      %p84 = scmp.eq.s32.totalorder %s23, 0
      %p85 = por %p83, %p84
      %p86 = scmp.ne.s32.totalorder %s78, %s80
      %p87 = scmp.eq.s32.totalorder %s28, 7
      %p88 = por %p86, %p87
      %p89 = scmp.ne.s32.totalorder %s80, %s81
      %p90 = scmp.eq.s32.totalorder %s28, 0
      %p91 = por %p89, %p90
      %p92 = scmp.ne.s32.totalorder %s80, %s81
      %p93 = scmp.eq.s32.totalorder %s29, 7
      %p94 = por %p92, %p93
      %p96 = scmp.ne.s32.totalorder %s81, %s95
      %p97 = scmp.eq.s32.totalorder %s29, 0
      %p98 = por %p96, %p97
      %s100 = sadd.s32 %s99, 1
      %p103 = scmp.eq.s32.totalorder %s23, 7
      %p104 = scmp.ne.s32.totalorder %s99, %s101
      %p105 = scmp.eq.s32.totalorder %s23, 0
      %p106 = por %p104, %p105
      %p107 = scmp.ne.s32.totalorder %s99, %s101
      %p108 = scmp.eq.s32.totalorder %s28, 7
      %p109 = por %p107, %p108
      %p110 = scmp.ne.s32.totalorder %s101, %s102
      %p111 = scmp.eq.s32.totalorder %s28, 0
      %p112 = por %p110, %p111
      %p113 = scmp.ne.s32.totalorder %s101, %s102
      %p114 = scmp.eq.s32.totalorder %s29, 7
      %p115 = por %p113, %p114
      %p117 = scmp.ne.s32.totalorder %s102, %s116
      %p118 = scmp.eq.s32.totalorder %s29, 0
      %p119 = por %p117, %p118
      %s121 = sadd.s32 %s120, 1
      %p124 = scmp.eq.s32.totalorder %s23, 7
      %p125 = scmp.ne.s32.totalorder %s120, %s122
      %p126 = scmp.eq.s32.totalorder %s23, 0
      %p127 = por %p125, %p126
      %p128 = scmp.ne.s32.totalorder %s120, %s122
      %p129 = scmp.eq.s32.totalorder %s28, 7
      %p130 = por %p128, %p129
      %p131 = scmp.ne.s32.totalorder %s122, %s123
      %p132 = scmp.eq.s32.totalorder %s28, 0
      %p133 = por %p131, %p132
      %p134 = scmp.ne.s32.totalorder %s122, %s123
      %p135 = scmp.eq.s32.totalorder %s29, 7
      %p136 = por %p134, %p135
      %p138 = scmp.ne.s32.totalorder %s123, %s137
      %p139 = scmp.eq.s32.totalorder %s29, 0
      %p140 = por %p138, %p139
      %s142 = sadd.s32 %s141, 1
      %p145 = scmp.eq.s32.totalorder %s23, 7
      %p146 = scmp.ne.s32.totalorder %s141, %s143
      %p147 = scmp.eq.s32.totalorder %s23, 0
      %p148 = por %p146, %p147
      %p149 = scmp.ne.s32.totalorder %s141, %s143
      %p150 = scmp.eq.s32.totalorder %s28, 7
      %p151 = por %p149, %p150
      %p152 = scmp.ne.s32.totalorder %s143, %s144
      %p153 = scmp.eq.s32.totalorder %s28, 0
      %p154 = por %p152, %p153
      %p155 = scmp.ne.s32.totalorder %s143, %s144
      %p156 = scmp.eq.s32.totalorder %s29, 7
      %p157 = por %p155, %p156
      %p159 = scmp.ne.s32.totalorder %s144, %s158
      %p160 = scmp.eq.s32.totalorder %s29, 0
      %p161 = por %p159, %p160
      %s163 = sadd.s32 %s162, 1
      %p166 = scmp.eq.s32.totalorder %s23, 7
      %p167 = scmp.ne.s32.totalorder %s162, %s164
      %p168 = scmp.eq.s32.totalorder %s23, 0
      %p169 = por %p167, %p168
      %p170 = scmp.ne.s32.totalorder %s162, %s164
      %p171 = scmp.eq.s32.totalorder %s28, 7
      %p172 = por %p170, %p171
      %p173 = scmp.ne.s32.totalorder %s164, %s165
      %p174 = scmp.eq.s32.totalorder %s28, 0
      %p175 = por %p173, %p174
      %p176 = scmp.ne.s32.totalorder %s164, %s165
      %p177 = scmp.eq.s32.totalorder %s29, 7
      %p178 = por %p176, %p177
      %p180 = scmp.ne.s32.totalorder %s165, %s179
      %p181 = scmp.eq.s32.totalorder %s29, 0
      %p182 = por %p180, %p181
      %s184 = sadd.s32 %s183, 1
      %p187 = scmp.eq.s32.totalorder %s23, 7
      %p188 = scmp.ne.s32.totalorder %s183, %s185
      %p189 = scmp.eq.s32.totalorder %s23, 0
      %p190 = por %p188, %p189
      %p191 = scmp.ne.s32.totalorder %s183, %s185
      %p192 = scmp.eq.s32.totalorder %s28, 7
      %p193 = por %p191, %p192
      %p194 = scmp.ne.s32.totalorder %s185, %s186
      %p195 = scmp.eq.s32.totalorder %s28, 0
      %p196 = por %p194, %p195
      %p197 = scmp.ne.s32.totalorder %s185, %s186
      %p198 = scmp.eq.s32.totalorder %s29, 7
      %p199 = por %p197, %p198
      %p201 = scmp.ne.s32.totalorder %s186, %s200
      %p202 = scmp.eq.s32.totalorder %s29, 0
      %p203 = por %p201, %p202
      %s205 = sadd.s32 %s204, 1
      %p208 = scmp.eq.s32.totalorder %s23, 7
      %p209 = scmp.ne.s32.totalorder %s204, %s206
      %p210 = scmp.eq.s32.totalorder %s23, 0
      %p211 = por %p209, %p210
      %p212 = scmp.ne.s32.totalorder %s204, %s206
      %p213 = scmp.eq.s32.totalorder %s28, 7
      %p214 = por %p212, %p213
      %p215 = scmp.ne.s32.totalorder %s206, %s207
      %p216 = scmp.eq.s32.totalorder %s28, 0
      %p217 = por %p215, %p216
      %p218 = scmp.ne.s32.totalorder %s206, %s207
      %p219 = scmp.eq.s32.totalorder %s29, 7
      %p220 = por %p218, %p219
      %p222 = scmp.ne.s32.totalorder %s207, %s221
      %p223 = scmp.eq.s32.totalorder %s29, 0
      %p224 = por %p222, %p223
      %s226 = sadd.s32 %s225, 1
      %p229 = scmp.eq.s32.totalorder %s23, 7
      %p230 = scmp.ne.s32.totalorder %s225, %s227
      %p231 = scmp.eq.s32.totalorder %s23, 0
      %p232 = por %p230, %p231
      %p233 = scmp.ne.s32.totalorder %s225, %s227
      %p234 = scmp.eq.s32.totalorder %s28, 7
      %p235 = por %p233, %p234
      %p236 = scmp.ne.s32.totalorder %s227, %s228
      %p237 = scmp.eq.s32.totalorder %s28, 0
      %p238 = por %p236, %p237
      %p239 = scmp.ne.s32.totalorder %s227, %s228
      %p240 = scmp.eq.s32.totalorder %s29, 7
      %p241 = por %p239, %p240
      %p243 = scmp.ne.s32.totalorder %s228, %s242
      %p244 = scmp.eq.s32.totalorder %s29, 0
      %p245 = por %p243, %p244
      %s246 = ssub.s32 %s23, %s30
      %p247 = scmp.eq.s32.totalorder %s246, 0
      %s249 = sadd.s32 %s248, 1
      %s250 = scalar_select %p247, %s248, %s249
      %p253 = pneg %p247
      %p254 = scmp.eq.s32.totalorder %s23, 7
      %p255 = por %p253, %p254
      %p256 = scmp.ne.s32.totalorder %s248, %s251
      %p257 = scmp.eq.s32.totalorder %s23, 0
      %p258 = por %p256, %p257
      %p259 = scmp.ne.s32.totalorder %s248, %s251
      %p260 = scmp.eq.s32.totalorder %s28, 7
      %p261 = por %p259, %p260
      %p262 = scmp.ne.s32.totalorder %s251, %s252
      %p263 = scmp.eq.s32.totalorder %s28, 0
      %p264 = por %p262, %p263
      %p265 = scmp.ne.s32.totalorder %s251, %s252
      %p266 = scmp.eq.s32.totalorder %s29, 7
      %p267 = por %p265, %p266
      %p269 = scmp.ne.s32.totalorder %s252, %s268
      %p270 = scmp.eq.s32.totalorder %s29, 0
      %p271 = por %p269, %p270
      %s273 = sadd.s32 %s272, 1
      %p276 = scmp.eq.s32.totalorder %s23, 7
      %p277 = scmp.ne.s32.totalorder %s272, %s274
      %p278 = scmp.eq.s32.totalorder %s23, 0
      %p279 = por %p277, %p278
      %p280 = scmp.ne.s32.totalorder %s272, %s274
      %p281 = scmp.eq.s32.totalorder %s28, 7
      %p282 = por %p280, %p281
      %p283 = scmp.ne.s32.totalorder %s274, %s275
      %p284 = scmp.eq.s32.totalorder %s28, 0
      %p285 = por %p283, %p284
      %p286 = scmp.ne.s32.totalorder %s274, %s275
      %p287 = scmp.eq.s32.totalorder %s29, 7
      %p288 = por %p286, %p287
      %p290 = scmp.ne.s32.totalorder %s275, %s289
      %p291 = scmp.eq.s32.totalorder %s29, 0
      %p292 = por %p290, %p291
      %p293 = scmp.le.s32.totalorder 1, %s23
      %p294 = scmp.lt.s32.totalorder %s23, 9
      %p295 = pnand %p293, %p294
      %p296 = pneg %p295
      // Predicated region
      $region9: #{encoder_forward_seq.1} parent=5 // pred_check
        _
      $region10: #{encoder_forward_seq.1} parent=5 // pred_check_branch
        %298 = sbr.rel (%p295) target = $region12
      $region11: #{encoder_forward_seq.1} parent=5 // pred_region
        %s299 = ssub.s32 %s23, 1
        // Predicated region
        $region13: #{encoder_forward_seq.1} parent=11 // pred_check
          %p300 = pneg %p70
        $region14: #{encoder_forward_seq.1} parent=11 // pred_check_branch
          %302 = sbr.rel (%p300) target = $region16
        $region15: #{encoder_forward_seq.1} parent=11 // pred_region
          _
        $region16: #{encoder_forward_seq.1} parent=11 // pred_fallthru
          _
        // Predicated region
        $region17: #{encoder_forward_seq.1} parent=11 // pred_check
          %p303 = pneg %p91
        $region18: #{encoder_forward_seq.1} parent=11 // pred_check_branch
          %305 = sbr.rel (%p303) target = $region20
        $region19: #{encoder_forward_seq.1} parent=11 // pred_region
          _
        $region20: #{encoder_forward_seq.1} parent=11 // pred_fallthru
          _
        // Predicated region
        $region21: #{encoder_forward_seq.1} parent=11 // pred_check
          %p306 = pneg %p112
        $region22: #{encoder_forward_seq.1} parent=11 // pred_check_branch
          %308 = sbr.rel (%p306) target = $region24
        $region23: #{encoder_forward_seq.1} parent=11 // pred_region
          %s310 = ssub.s32 8192, 8192
          %311 = vsyncadd [#allocation3], %s310
          %s312 = sshll.u32 [#allocation2], 4
          %s313 = int_to_ptr.vmem [resolvable:$true] %s312
          %318 = dma.hbm_to_vmem [thread:$0]  %s3, 8192, %s313, [#allocation3], 128, 128, 8
        $region24: #{encoder_forward_seq.1} parent=11 // pred_fallthru
          _
        // Predicated region
        $region25: #{encoder_forward_seq.1} parent=11 // pred_check
          %p319 = pneg %p133
        $region26: #{encoder_forward_seq.1} parent=11 // pred_check_branch
          %321 = sbr.rel (%p319) target = $region28
        $region27: #{encoder_forward_seq.1} parent=11 // pred_region
          %s323 = ssub.s32 12288, 12288
          %324 = vsyncadd [#allocation6], %s323
          %s325 = sshll.u32 [#allocation5], 4
          %s326 = int_to_ptr.vmem [resolvable:$true] %s325
          %331 = dma.hbm_to_vmem [thread:$0]  %s4, 12288, %s326, [#allocation6], 128, 128, 8
        $region28: #{encoder_forward_seq.1} parent=11 // pred_fallthru
          _
        // Predicated region
        $region29: #{encoder_forward_seq.1} parent=11 // pred_check
          %p332 = pneg %p154
        $region30: #{encoder_forward_seq.1} parent=11 // pred_check_branch
          %334 = sbr.rel (%p332) target = $region32
        $region31: #{encoder_forward_seq.1} parent=11 // pred_region
          %s336 = ssub.s32 8192, 8192
          %337 = vsyncadd [#allocation6], %s336
          %s338 = sshll.u32 [#allocation7], 4
          %s339 = int_to_ptr.vmem [resolvable:$true] %s338
          %344 = dma.hbm_to_vmem [thread:$0]  %s5, 8192, %s339, [#allocation6], 128, 128, 8
        $region32: #{encoder_forward_seq.1} parent=11 // pred_fallthru
          _
        // Predicated region
        $region33: #{encoder_forward_seq.1} parent=11 // pred_check
          %p345 = pneg %p175
        $region34: #{encoder_forward_seq.1} parent=11 // pred_check_branch
          %347 = sbr.rel (%p345) target = $region36
        $region35: #{encoder_forward_seq.1} parent=11 // pred_region
          _
        $region36: #{encoder_forward_seq.1} parent=11 // pred_fallthru
          _
        // Predicated region
        $region37: #{encoder_forward_seq.1} parent=11 // pred_check
          %p348 = pneg %p196
        $region38: #{encoder_forward_seq.1} parent=11 // pred_check_branch
          %350 = sbr.rel (%p348) target = $region40
        $region39: #{encoder_forward_seq.1} parent=11 // pred_region
          _
        $region40: #{encoder_forward_seq.1} parent=11 // pred_fallthru
          _
        // Predicated region
        $region41: #{encoder_forward_seq.1} parent=11 // pred_check
          %p351 = pneg %p217
        $region42: #{encoder_forward_seq.1} parent=11 // pred_check_branch
          %353 = sbr.rel (%p351) target = $region44
        $region43: #{encoder_forward_seq.1} parent=11 // pred_region
          _
        $region44: #{encoder_forward_seq.1} parent=11 // pred_fallthru
          _
        // Predicated region
        $region45: #{encoder_forward_seq.1} parent=11 // pred_check
          %p354 = pneg %p238
        $region46: #{encoder_forward_seq.1} parent=11 // pred_check_branch
          %356 = sbr.rel (%p354) target = $region48
        $region47: #{encoder_forward_seq.1} parent=11 // pred_region
          _
        $region48: #{encoder_forward_seq.1} parent=11 // pred_fallthru
          _
      $region12: #{encoder_forward_seq.1} parent=5 // pred_fallthru
        _
      %p357 = scmp.lt.s32.totalorder %s23, 8
      // Predicated region
      $region49: #{encoder_forward_seq.1} parent=5 // pred_check
        %p358 = pneg %p357
      $region50: #{encoder_forward_seq.1} parent=5 // pred_check_branch
        %360 = sbr.rel (%p358) target = $region52
      $region51: #{encoder_forward_seq.1} parent=5 // pred_region
        // Predicated region
        $region53: #{encoder_forward_seq.1} parent=51 // pred_check
          %p361 = pneg %p43
        $region54: #{encoder_forward_seq.1} parent=51 // pred_check_branch
          %363 = sbr.rel (%p361) target = $region56
        $region55: #{encoder_forward_seq.1} parent=51 // pred_region
          %p364 = scmp.lt.s32.totalorder %s23, 7
          %s365 = scalar_select %p364, %s23, 7
          %s366 = smul.addr %s365, 2
          %s367 = scalar_lea.vmem %s0, %s366
        $region56: #{encoder_forward_seq.1} parent=51 // pred_fallthru
          _
      $region52: #{encoder_forward_seq.1} parent=5 // pred_fallthru
        _
      %p368 = scmp.le.s32.totalorder 1, %s23
      %p369 = scmp.lt.s32.totalorder %s23, 9
      %p370 = pnand %p368, %p369
      %p371 = pneg %p370
      // Predicated region
      $region57: #{encoder_forward_seq.1} parent=5 // pred_check
        _
      $region58: #{encoder_forward_seq.1} parent=5 // pred_check_branch
        %373 = sbr.rel (%p370) target = $region60
      $region59: #{encoder_forward_seq.1} parent=5 // pred_region
        %s374 = ssub.s32 %s23, 1
        // Predicated region
        $region61: #{encoder_forward_seq.1} parent=59 // pred_check
          %p375 = pneg %p112
        $region62: #{encoder_forward_seq.1} parent=59 // pred_check_branch
          %377 = sbr.rel (%p375) target = $region64
        $region63: #{encoder_forward_seq.1} parent=59 // pred_region
          %378 = dma.done [#allocation3], 8192
        $region64: #{encoder_forward_seq.1} parent=59 // pred_fallthru
          _
        // Predicated region
        $region65: #{encoder_forward_seq.1} parent=59 // pred_check
          %p379 = pneg %p133
        $region66: #{encoder_forward_seq.1} parent=59 // pred_check_branch
          %381 = sbr.rel (%p379) target = $region68
        $region67: #{encoder_forward_seq.1} parent=59 // pred_region
          %382 = dma.done [#allocation6], 12288
        $region68: #{encoder_forward_seq.1} parent=59 // pred_fallthru
          _
        // Predicated region
        $region69: #{encoder_forward_seq.1} parent=59 // pred_check
          %p383 = pneg %p154
        $region70: #{encoder_forward_seq.1} parent=59 // pred_check_branch
          %385 = sbr.rel (%p383) target = $region72
        $region71: #{encoder_forward_seq.1} parent=59 // pred_region
          %386 = dma.done [#allocation6], 8192
        $region72: #{encoder_forward_seq.1} parent=59 // pred_fallthru
          _
        %p387 = scmp.lt.s32.totalorder %s28, 7
        %s388 = scalar_select %p387, %s28, 7
        %s389 = smul.addr %s388, 2
        %s390 = scalar_lea.vmem %s0, %s389
        %p391 = pneg %p49
        %p392 = pneg %p46
        %p393 = pneg %p70
        %p394 = pneg %p67
        %p395 = pneg %p91
        %p396 = pneg %p88
        %p397 = pneg %p112
        %p398 = pneg %p109
        %p399 = pneg %p133
        %p400 = pneg %p130
        %p401 = pneg %p154
        %p402 = pneg %p151
        %p403 = pneg %p175
        %p404 = pneg %p172
        %p405 = pneg %p196
        %p406 = pneg %p193
        %p407 = pneg %p217
        %p408 = pneg %p214
        %p409 = pneg %p238
        %p410 = pneg %p235
        %p411 = pneg %p264
        %p412 = pneg %p261
        %s413 = sand.u32 %s251, 1
        %s414 = scalar_lea.sflag [#allocation4], %s413
        %s415 = sand.u32 %s251, 1
        %s416 = smul.addr %s415, 4
        %s417 = scalar_lea.vmem [#allocation8], %s416
        %p418 = pneg %p285
        %p419 = pneg %p282
        %p420 = scmp.lt.s32.totalorder %s28, 7
        %s421 = scalar_select %p420, %s28, 7
        %s422 = smul.addr %s421, 2
        %s423 = scalar_lea.vmem %s0, %s422
        %p424 = scmp.eq.s32.totalorder %s28, 0
        // Predicated region
        $region73: #{encoder_forward_seq.1} parent=59 // pred_check
          %p425 = pneg %p424
        $region74: #{encoder_forward_seq.1} parent=59 // pred_check_branch
          %427 = sbr.rel (%p425) target = $region76
        $region75: #{encoder_forward_seq.1} parent=59 // pred_region
          %v428 = vld [vmem:[%s1] sm:$0xf]
          %v429 = vld [vmem:[%s1 + $0x4] sm:$0xf]
          %v430 = vld [vmem:[%s1 + $0x8] sm:$0xf]
          %v431 = vld [vmem:[%s1 + $0xc] sm:$0xf]
          %v432 = vld [vmem:[%s1 + $0x10] sm:$0xf]
          %v433 = vld [vmem:[%s1 + $0x14] sm:$0xf]
          %434 = vst [vmem:[%s11] sm:$0xf] %v428
          %435 = vst [vmem:[%s11 + $0x4] sm:$0xf] %v429
          %436 = vst [vmem:[%s11 + $0x8] sm:$0xf] %v430
          %437 = vst [vmem:[%s11 + $0xc] sm:$0xf] %v431
          %438 = vst [vmem:[%s11 + $0x10] sm:$0xf] %v432
          %439 = vst [vmem:[%s11 + $0x14] sm:$0xf] %v433
        $region76: #{encoder_forward_seq.1} parent=59 // pred_fallthru
          _
        %v440 = vld [vmem:[%s423] sm:$0x3]
        %s441 = scalar_lea.vmem %s11, 8
        %v442 = vld [vmem:[%s441] sm:$0xf]
        %s443 = scalar_lea.vmem %s11, 4
        %v444 = vld [vmem:[%s443] sm:$0xf]
        %v447 = vunpack.c.l.s4 1983009808
        %v448 = vunpack.c.0.s8 %v447
        %v449 = vlaneseq
        %v450 = vshrl.u32 %v449, 7
        %v451 = vsub.s32 %v448, %v450
        %v452 = vrot.slane %v442, %v451
        %v453 = vcombine.high %v452, %v452
        %v458 = vunpack.c.l.s4 1983009808
        %v459 = vunpack.c.0.s8 %v458
        %v460 = vlaneseq
        %v461 = vshrl.u32 %v460, 7
        %v462 = vsub.s32 %v459, %v461
        %v463 = vrot.slane %v444, %v462
        %v464 = vcombine.high %v463, %v463
        %v467 = vpack.c.bf16 %v452, %v452
        %v468 = vpack.c.bf16 %v453, %v453
        %v469 = vpack.c.bf16 %v463, %v463
        %v470 = vpack.c.bf16 %v464, %v464
        %v471 = vld [vmem:[%s2] sm:$0xff]
        %v472 = vld [vmem:[%s2 + $0x8] sm:$0xff]
        %v473 = vld [vmem:[#allocation2] sm:$0xff]
        %v474 = vld [vmem:[#allocation2 + $0x8] sm:$0xff]
        %v475 = vld [vmem:[#allocation2 + $0x10] sm:$0xff]
        %v476 = vld [vmem:[#allocation2 + $0x18] sm:$0xff]
        %v477 = vld [vmem:[#allocation2 + $0x20] sm:$0xff]
        %v478 = vld [vmem:[#allocation2 + $0x28] sm:$0xff]
        %v479 = vld [vmem:[#allocation2 + $0x30] sm:$0xff]
        %v480 = vld [vmem:[#allocation2 + $0x38] sm:$0xff]
        %v481 = vld [vmem:[#allocation2 + $0x40] sm:$0xff]
        %v482 = vld [vmem:[#allocation2 + $0x48] sm:$0xff]
        %v483 = vld [vmem:[#allocation2 + $0x50] sm:$0xff]
        %v484 = vld [vmem:[#allocation2 + $0x58] sm:$0xff]
        %v485 = vld [vmem:[#allocation2 + $0x60] sm:$0xff]
        %v486 = vld [vmem:[#allocation2 + $0x68] sm:$0xff]
        %v487 = vld [vmem:[#allocation2 + $0x70] sm:$0xff]
        %v488 = vld [vmem:[#allocation2 + $0x78] sm:$0xff]
        %v489 = vld [vmem:[#allocation2 + $0x80] sm:$0xff]
        %v490 = vld [vmem:[#allocation2 + $0x88] sm:$0xff]
        %v491 = vld [vmem:[#allocation2 + $0x90] sm:$0xff]
        %v492 = vld [vmem:[#allocation2 + $0x98] sm:$0xff]
        %v493 = vld [vmem:[#allocation2 + $0xa0] sm:$0xff]
        %v494 = vld [vmem:[#allocation2 + $0xa8] sm:$0xff]
        %v495 = vld [vmem:[#allocation2 + $0xb0] sm:$0xff]
        %v496 = vld [vmem:[#allocation2 + $0xb8] sm:$0xff]
        %v497 = vld [vmem:[#allocation2 + $0xc0] sm:$0xff]
        %v498 = vld [vmem:[#allocation2 + $0xc8] sm:$0xff]
        %v499 = vld [vmem:[#allocation2 + $0xd0] sm:$0xff]
        %v500 = vld [vmem:[#allocation2 + $0xd8] sm:$0xff]
        %v501 = vld [vmem:[#allocation2 + $0xe0] sm:$0xff]
        %v502 = vld [vmem:[#allocation2 + $0xe8] sm:$0xff]
        %v503 = vld [vmem:[#allocation2 + $0xf0] sm:$0xff]
        %v504 = vld [vmem:[#allocation2 + $0xf8] sm:$0xff]
        %v505 = vld [vmem:[#allocation2 + $0x100] sm:$0xff]
        %v506 = vld [vmem:[#allocation2 + $0x108] sm:$0xff]
        %v507 = vld [vmem:[#allocation2 + $0x110] sm:$0xff]
        %v508 = vld [vmem:[#allocation2 + $0x118] sm:$0xff]
        %v509 = vld [vmem:[#allocation2 + $0x120] sm:$0xff]
        %v510 = vld [vmem:[#allocation2 + $0x128] sm:$0xff]
        %v511 = vld [vmem:[#allocation2 + $0x130] sm:$0xff]
        %v512 = vld [vmem:[#allocation2 + $0x138] sm:$0xff]
        %v513 = vld [vmem:[#allocation2 + $0x140] sm:$0xff]
        %v514 = vld [vmem:[#allocation2 + $0x148] sm:$0xff]
        %v515 = vld [vmem:[#allocation2 + $0x150] sm:$0xff]
        %v516 = vld [vmem:[#allocation2 + $0x158] sm:$0xff]
        %v517 = vld [vmem:[#allocation2 + $0x160] sm:$0xff]
        %v518 = vld [vmem:[#allocation2 + $0x168] sm:$0xff]
        %v519 = vld [vmem:[#allocation2 + $0x170] sm:$0xff]
        %v520 = vld [vmem:[#allocation2 + $0x178] sm:$0xff]
        %v521 = vld [vmem:[#allocation2 + $0x180] sm:$0xff]
        %v522 = vld [vmem:[#allocation2 + $0x188] sm:$0xff]
        %v523 = vld [vmem:[#allocation2 + $0x190] sm:$0xff]
        %v524 = vld [vmem:[#allocation2 + $0x198] sm:$0xff]
        %v525 = vld [vmem:[#allocation2 + $0x1a0] sm:$0xff]
        %v526 = vld [vmem:[#allocation2 + $0x1a8] sm:$0xff]
        %v527 = vld [vmem:[#allocation2 + $0x1b0] sm:$0xff]
        %v528 = vld [vmem:[#allocation2 + $0x1b8] sm:$0xff]
        %v529 = vld [vmem:[#allocation2 + $0x1c0] sm:$0xff]
        %v530 = vld [vmem:[#allocation2 + $0x1c8] sm:$0xff]
        %v531 = vld [vmem:[#allocation2 + $0x1d0] sm:$0xff]
        %v532 = vld [vmem:[#allocation2 + $0x1d8] sm:$0xff]
        %v533 = vld [vmem:[#allocation2 + $0x1e0] sm:$0xff]
        %v534 = vld [vmem:[#allocation2 + $0x1e8] sm:$0xff]
        %v535 = vld [vmem:[#allocation2 + $0x1f0] sm:$0xff]
        %v536 = vld [vmem:[#allocation2 + $0x1f8] sm:$0xff]
        %v601 = vunpack.c.l.b16 %v473
        %v602 = vunpack.c.h.b16 %v473
        %v603 = vunpack.c.l.b16 %v474
        %v604 = vunpack.c.h.b16 %v474
        %v605 = vunpack.c.l.b16 %v475
        %v606 = vunpack.c.h.b16 %v475
        %v607 = vunpack.c.l.b16 %v476
        %v608 = vunpack.c.h.b16 %v476
        %v609 = vunpack.c.l.b16 %v477
        %v610 = vunpack.c.h.b16 %v477
        %v611 = vunpack.c.l.b16 %v478
        %v612 = vunpack.c.h.b16 %v478
        %v613 = vunpack.c.l.b16 %v479
        %v614 = vunpack.c.h.b16 %v479
        %v615 = vunpack.c.l.b16 %v480
        %v616 = vunpack.c.h.b16 %v480
        %v617 = vunpack.c.l.b16 %v481
        %v618 = vunpack.c.h.b16 %v481
        %v619 = vunpack.c.l.b16 %v482
        %v620 = vunpack.c.h.b16 %v482
        %v621 = vunpack.c.l.b16 %v483
        %v622 = vunpack.c.h.b16 %v483
        %v623 = vunpack.c.l.b16 %v484
        %v624 = vunpack.c.h.b16 %v484
        %v625 = vunpack.c.l.b16 %v485
        %v626 = vunpack.c.h.b16 %v485
        %v627 = vunpack.c.l.b16 %v486
        %v628 = vunpack.c.h.b16 %v486
        %v629 = vunpack.c.l.b16 %v487
        %v630 = vunpack.c.h.b16 %v487
        %v631 = vunpack.c.l.b16 %v488
        %v632 = vunpack.c.h.b16 %v488
        %v633 = vunpack.c.l.b16 %v489
        %v634 = vunpack.c.h.b16 %v489
        %v635 = vunpack.c.l.b16 %v490
        %v636 = vunpack.c.h.b16 %v490
        %v637 = vunpack.c.l.b16 %v491
        %v638 = vunpack.c.h.b16 %v491
        %v639 = vunpack.c.l.b16 %v492
        %v640 = vunpack.c.h.b16 %v492
        %v641 = vunpack.c.l.b16 %v493
        %v642 = vunpack.c.h.b16 %v493
        %v643 = vunpack.c.l.b16 %v494
        %v644 = vunpack.c.h.b16 %v494
        %v645 = vunpack.c.l.b16 %v495
        %v646 = vunpack.c.h.b16 %v495
        %v647 = vunpack.c.l.b16 %v496
        %v648 = vunpack.c.h.b16 %v496
        %v649 = vunpack.c.l.b16 %v497
        %v650 = vunpack.c.h.b16 %v497
        %v651 = vunpack.c.l.b16 %v498
        %v652 = vunpack.c.h.b16 %v498
        %v653 = vunpack.c.l.b16 %v499
        %v654 = vunpack.c.h.b16 %v499
        %v655 = vunpack.c.l.b16 %v500
        %v656 = vunpack.c.h.b16 %v500
        %v657 = vunpack.c.l.b16 %v501
        %v658 = vunpack.c.h.b16 %v501
        %v659 = vunpack.c.l.b16 %v502
        %v660 = vunpack.c.h.b16 %v502
        %v661 = vunpack.c.l.b16 %v503
        %v662 = vunpack.c.h.b16 %v503
        %v663 = vunpack.c.l.b16 %v504
        %v664 = vunpack.c.h.b16 %v504
        %v665 = vunpack.c.l.b16 %v505
        %v666 = vunpack.c.h.b16 %v505
        %v667 = vunpack.c.l.b16 %v506
        %v668 = vunpack.c.h.b16 %v506
        %v669 = vunpack.c.l.b16 %v507
        %v670 = vunpack.c.h.b16 %v507
        %v671 = vunpack.c.l.b16 %v508
        %v672 = vunpack.c.h.b16 %v508
        %v673 = vunpack.c.l.b16 %v509
        %v674 = vunpack.c.h.b16 %v509
        %v675 = vunpack.c.l.b16 %v510
        %v676 = vunpack.c.h.b16 %v510
        %v677 = vunpack.c.l.b16 %v511
        %v678 = vunpack.c.h.b16 %v511
        %v679 = vunpack.c.l.b16 %v512
        %v680 = vunpack.c.h.b16 %v512
        %v681 = vunpack.c.l.b16 %v513
        %v682 = vunpack.c.h.b16 %v513
        %v683 = vunpack.c.l.b16 %v514
        %v684 = vunpack.c.h.b16 %v514
        %v685 = vunpack.c.l.b16 %v515
        %v686 = vunpack.c.h.b16 %v515
        %v687 = vunpack.c.l.b16 %v516
        %v688 = vunpack.c.h.b16 %v516
        %v689 = vunpack.c.l.b16 %v517
        %v690 = vunpack.c.h.b16 %v517
        %v691 = vunpack.c.l.b16 %v518
        %v692 = vunpack.c.h.b16 %v518
        %v693 = vunpack.c.l.b16 %v519
        %v694 = vunpack.c.h.b16 %v519
        %v695 = vunpack.c.l.b16 %v520
        %v696 = vunpack.c.h.b16 %v520
        %v697 = vunpack.c.l.b16 %v521
        %v698 = vunpack.c.h.b16 %v521
        %v699 = vunpack.c.l.b16 %v522
        %v700 = vunpack.c.h.b16 %v522
        %v701 = vunpack.c.l.b16 %v523
        %v702 = vunpack.c.h.b16 %v523
        %v703 = vunpack.c.l.b16 %v524
        %v704 = vunpack.c.h.b16 %v524
        %v705 = vunpack.c.l.b16 %v525
        %v706 = vunpack.c.h.b16 %v525
        %v707 = vunpack.c.l.b16 %v526
        %v708 = vunpack.c.h.b16 %v526
        %v709 = vunpack.c.l.b16 %v527
        %v710 = vunpack.c.h.b16 %v527
        %v711 = vunpack.c.l.b16 %v528
        %v712 = vunpack.c.h.b16 %v528
        %v713 = vunpack.c.l.b16 %v529
        %v714 = vunpack.c.h.b16 %v529
        %v715 = vunpack.c.l.b16 %v530
        %v716 = vunpack.c.h.b16 %v530
        %v717 = vunpack.c.l.b16 %v531
        %v718 = vunpack.c.h.b16 %v531
        %v719 = vunpack.c.l.b16 %v532
        %v720 = vunpack.c.h.b16 %v532
        %v721 = vunpack.c.l.b16 %v533
        %v722 = vunpack.c.h.b16 %v533
        %v723 = vunpack.c.l.b16 %v534
        %v724 = vunpack.c.h.b16 %v534
        %v725 = vunpack.c.l.b16 %v535
        %v726 = vunpack.c.h.b16 %v535
        %v727 = vunpack.c.l.b16 %v536
        %v728 = vunpack.c.h.b16 %v536
        %v729 = vpack.c.b16 %v603, %v601
        %v730 = vpack.c.b16 %v604, %v602
        %v731 = vpack.c.b16 %v607, %v605
        %v732 = vpack.c.b16 %v608, %v606
        %v733 = vpack.c.b16 %v611, %v609
        %v734 = vpack.c.b16 %v612, %v610
        %v735 = vpack.c.b16 %v615, %v613
        %v736 = vpack.c.b16 %v616, %v614
        %v737 = vpack.c.b16 %v619, %v617
        %v738 = vpack.c.b16 %v620, %v618
        %v739 = vpack.c.b16 %v623, %v621
        %v740 = vpack.c.b16 %v624, %v622
        %v741 = vpack.c.b16 %v627, %v625
        %v742 = vpack.c.b16 %v628, %v626
        %v743 = vpack.c.b16 %v631, %v629
        %v744 = vpack.c.b16 %v632, %v630
        %v745 = vpack.c.b16 %v635, %v633
        %v746 = vpack.c.b16 %v636, %v634
        %v747 = vpack.c.b16 %v639, %v637
        %v748 = vpack.c.b16 %v640, %v638
        %v749 = vpack.c.b16 %v643, %v641
        %v750 = vpack.c.b16 %v644, %v642
        %v751 = vpack.c.b16 %v647, %v645
        %v752 = vpack.c.b16 %v648, %v646
        %v753 = vpack.c.b16 %v651, %v649
        %v754 = vpack.c.b16 %v652, %v650
        %v755 = vpack.c.b16 %v655, %v653
        %v756 = vpack.c.b16 %v656, %v654
        %v757 = vpack.c.b16 %v659, %v657
        %v758 = vpack.c.b16 %v660, %v658
        %v759 = vpack.c.b16 %v663, %v661
        %v760 = vpack.c.b16 %v664, %v662
        %v761 = vpack.c.b16 %v667, %v665
        %v762 = vpack.c.b16 %v668, %v666
        %v763 = vpack.c.b16 %v671, %v669
        %v764 = vpack.c.b16 %v672, %v670
        %v765 = vpack.c.b16 %v675, %v673
        %v766 = vpack.c.b16 %v676, %v674
        %v767 = vpack.c.b16 %v679, %v677
        %v768 = vpack.c.b16 %v680, %v678
        %v769 = vpack.c.b16 %v683, %v681
        %v770 = vpack.c.b16 %v684, %v682
        %v771 = vpack.c.b16 %v687, %v685
        %v772 = vpack.c.b16 %v688, %v686
        %v773 = vpack.c.b16 %v691, %v689
        %v774 = vpack.c.b16 %v692, %v690
        %v775 = vpack.c.b16 %v695, %v693
        %v776 = vpack.c.b16 %v696, %v694
        %v777 = vpack.c.b16 %v699, %v697
        %v778 = vpack.c.b16 %v700, %v698
        %v779 = vpack.c.b16 %v703, %v701
        %v780 = vpack.c.b16 %v704, %v702
        %v781 = vpack.c.b16 %v707, %v705
        %v782 = vpack.c.b16 %v708, %v706
        %v783 = vpack.c.b16 %v711, %v709
        %v784 = vpack.c.b16 %v712, %v710
        %v785 = vpack.c.b16 %v715, %v713
        %v786 = vpack.c.b16 %v716, %v714
        %v787 = vpack.c.b16 %v719, %v717
        %v788 = vpack.c.b16 %v720, %v718
        %v789 = vpack.c.b16 %v723, %v721
        %v790 = vpack.c.b16 %v724, %v722
        %v791 = vpack.c.b16 %v727, %v725
        %v792 = vpack.c.b16 %v728, %v726
        %857 = vmatprep.subr.bf16.mxu0 %v744
        %858 = vmatpush1.bf16.msra.mxu0 %v743
        %859 = vmatprep.subr.bf16.mxu0 %v742
        %860 = vmatpush1.bf16.msra.mxu0 %v741
        %861 = vmatprep.subr.bf16.mxu0 %v740
        %862 = vmatpush1.bf16.msra.mxu0 %v739
        %863 = vmatprep.subr.bf16.mxu0 %v738
        %864 = vmatpush1.bf16.msra.mxu0 %v737
        %865 = vmatprep.subr.bf16.mxu0 %v736
        %866 = vmatpush1.bf16.msra.mxu0 %v735
        %867 = vmatprep.subr.bf16.mxu0 %v734
        %868 = vmatpush1.bf16.msra.mxu0 %v733
        %869 = vmatprep.subr.bf16.mxu0 %v732
        %870 = vmatpush1.bf16.msra.mxu0 %v731
        %871 = vmatprep.subr.bf16.mxu0 %v730
        %872 = vmatpush1.bf16.msra.mxu0 %v729
        %873 = vmatprep.subr.bf16.mxu0 %v760
        %874 = vmatpush2.bf16.msra.mxu0 %v759
        %875 = vmatprep.subr.bf16.mxu0 %v758
        %876 = vmatpush2.bf16.msra.mxu0 %v757
        %877 = vmatprep.subr.bf16.mxu0 %v756
        %878 = vmatpush2.bf16.msra.mxu0 %v755
        %879 = vmatprep.subr.bf16.mxu0 %v754
        %880 = vmatpush2.bf16.msra.mxu0 %v753
        %881 = vmatprep.subr.bf16.mxu0 %v752
        %882 = vmatpush2.bf16.msra.mxu0 %v751
        %883 = vmatprep.subr.bf16.mxu0 %v750
        %884 = vmatpush2.bf16.msra.mxu0 %v749
        %885 = vmatprep.subr.bf16.mxu0 %v748
        %886 = vmatpush2.bf16.msra.mxu0 %v747
        %887 = vmatprep.subr.bf16.mxu0 %v746
        %888 = vmatpush2.bf16.msra.mxu0 %v745
        %889 = vmatprep.mubr.bf16.mxu0 %v468
        %890 = vmatmul.mubr.bf16.gmra.mxu0 %v467
        %v891 = vpop.f32.mrf.mxu0
        %v892 = vadd.f32 0.0, %v891
        %v893 = vpop.f32.mrf.mxu0
        %v894 = vadd.f32 0.0, %v893
        %v895 = vpop.f32.mrf.mxu0
        %v896 = vpop.f32.mrf.mxu0
        %897 = vdwg.mxu0
        %898 = vmatprep.subr.bf16.mxu0 %v776
        %899 = vmatpush1.bf16.msra.mxu0 %v775
        %900 = vmatprep.subr.bf16.mxu0 %v774
        %901 = vmatpush1.bf16.msra.mxu0 %v773
        %902 = vmatprep.subr.bf16.mxu0 %v772
        %903 = vmatpush1.bf16.msra.mxu0 %v771
        %904 = vmatprep.subr.bf16.mxu0 %v770
        %905 = vmatpush1.bf16.msra.mxu0 %v769
        %906 = vmatprep.subr.bf16.mxu0 %v768
        %907 = vmatpush1.bf16.msra.mxu0 %v767
        %908 = vmatprep.subr.bf16.mxu0 %v766
        %909 = vmatpush1.bf16.msra.mxu0 %v765
        %910 = vmatprep.subr.bf16.mxu0 %v764
        %911 = vmatpush1.bf16.msra.mxu0 %v763
        %912 = vmatprep.subr.bf16.mxu0 %v762
        %913 = vmatpush1.bf16.msra.mxu0 %v761
        %914 = vmatprep.subr.bf16.mxu0 %v792
        %915 = vmatpush2.bf16.msra.mxu0 %v791
        %916 = vmatprep.subr.bf16.mxu0 %v790
        %917 = vmatpush2.bf16.msra.mxu0 %v789
        %918 = vmatprep.subr.bf16.mxu0 %v788
        %919 = vmatpush2.bf16.msra.mxu0 %v787
        %920 = vmatprep.subr.bf16.mxu0 %v786
        %921 = vmatpush2.bf16.msra.mxu0 %v785
        %922 = vmatprep.subr.bf16.mxu0 %v784
        %923 = vmatpush2.bf16.msra.mxu0 %v783
        %924 = vmatprep.subr.bf16.mxu0 %v782
        %925 = vmatpush2.bf16.msra.mxu0 %v781
        %926 = vmatprep.subr.bf16.mxu0 %v780
        %927 = vmatpush2.bf16.msra.mxu0 %v779
        %928 = vmatprep.subr.bf16.mxu0 %v778
        %929 = vmatpush2.bf16.msra.mxu0 %v777
        %930 = vmatprep.mubr.bf16.mxu0 %v470
        %931 = vmatmul.mubr.bf16.gmra.mxu0 %v469
        %v932 = vpop.f32.mrf.mxu0
        %v933 = vadd.f32 %v892, %v932
        %v934 = vpop.f32.mrf.mxu0
        %v935 = vadd.f32 %v894, %v934
        %v936 = vpop.f32.mrf.mxu0
        %v937 = vpop.f32.mrf.mxu0
        %938 = vdwg.mxu0
        %vm939 = vcmask 64512
        %v941 = vsel %vm939, %v440, 0
        %943 = vmatprep.subr.mxu0 0.0
        %944 = vmatpush1.msra.mxu0 0.0
        %945 = vmatprep.subr.mxu0 0.0
        %946 = vmatpush1.msra.mxu0 0.0
        %947 = vmatprep.subr.mxu0 0.0
        %948 = vmatpush1.msra.mxu0 0.0
        %949 = vmatprep.subr.mxu0 0.0
        %950 = vmatpush1.msra.mxu0 0.0
        %951 = vmatprep.subr.mxu0 0.0
        %952 = vmatpush1.msra.mxu0 0.0
        %953 = vmatprep.subr.mxu0 0.0
        %954 = vmatpush1.msra.mxu0 0.0
        %955 = vmatprep.subr.mxu0 0.0
        %956 = vmatpush1.msra.mxu0 0.0
        %957 = vmatprep.subr.mxu0 0.0
        %958 = vmatpush1.msra.mxu0 0.0
        %959 = vmatprep.subr.mxu0 0.0
        %960 = vmatpush1.msra.mxu0 0.0
        %961 = vmatprep.subr.mxu0 0.0
        %962 = vmatpush1.msra.mxu0 0.0
        %963 = vmatprep.subr.mxu0 0.0
        %964 = vmatpush1.msra.mxu0 0.0
        %965 = vmatprep.subr.mxu0 0.0
        %966 = vmatpush1.msra.mxu0 0.0
        %967 = vmatprep.subr.mxu0 0.0
        %968 = vmatpush1.msra.mxu0 0.0
        %969 = vmatprep.subr.mxu0 0.0
        %970 = vmatpush1.msra.mxu0 0.0
        %971 = vmatprep.subr.mxu0 0.0
        %972 = vmatpush1.msra.mxu0 0.0
        %973 = vmatprep.subr.mxu0 %v472
        %974 = vmatpush1.msra.mxu0 %v471
        %975 = vmatprep.subr.mxu0 0.0
        %976 = vmatpush2.msra.mxu0 0.0
        %977 = vmatprep.subr.mxu0 0.0
        %978 = vmatpush2.msra.mxu0 0.0
        %979 = vmatprep.subr.mxu0 0.0
        %980 = vmatpush2.msra.mxu0 0.0
        %981 = vmatprep.subr.mxu0 0.0
        %982 = vmatpush2.msra.mxu0 0.0
        %983 = vmatprep.subr.mxu0 0.0
        %984 = vmatpush2.msra.mxu0 0.0
        %985 = vmatprep.subr.mxu0 0.0
        %986 = vmatpush2.msra.mxu0 0.0
        %987 = vmatprep.subr.mxu0 0.0
        %988 = vmatpush2.msra.mxu0 0.0
        %989 = vmatprep.subr.mxu0 0.0
        %990 = vmatpush2.msra.mxu0 0.0
        %991 = vmatprep.subr.mxu0 0.0
        %992 = vmatpush2.msra.mxu0 0.0
        %993 = vmatprep.subr.mxu0 0.0
        %994 = vmatpush2.msra.mxu0 0.0
        %995 = vmatprep.subr.mxu0 0.0
        %996 = vmatpush2.msra.mxu0 0.0
        %997 = vmatprep.subr.mxu0 0.0
        %998 = vmatpush2.msra.mxu0 0.0
        %999 = vmatprep.subr.mxu0 0.0
        %1000 = vmatpush2.msra.mxu0 0.0
        %1001 = vmatprep.subr.mxu0 0.0
        %1002 = vmatpush2.msra.mxu0 0.0
        %1003 = vmatprep.subr.mxu0 0.0
        %1004 = vmatpush2.msra.mxu0 0.0
        %1005 = vmatprep.subr.mxu0 0.0
        %1006 = vmatpush2.msra.mxu0 0.0
        %1007 = vmatprep.mubr.f32.mxu0 0.0
        %1008 = vmatmul.mubr.f32.gmra.mxu0 %v941
        %v1009 = vpop.f32.mrf.mxu0
        %v1010 = vadd.f32 %v933, %v1009
        %v1011 = vpop.f32.mrf.mxu0
        %v1012 = vadd.f32 %v935, %v1011
        %1013 = vdwg.mxu0
        %v1014 = vld [vmem:[%s6] sm:$0x3]
        %v1016 = vlaneseq
        %v1017 = vshrl.u32 %v1016, 7
        %v1018 = vsub.s32 0, %v1017
        %v1019 = vrot.slane %v1014, %v1018
        %v1020 = vlaneseq
        %v1021 = vshrl.u32 %v1020, 7
        %v1022 = vsub.s32 1, %v1021
        %v1023 = vrot.slane %v1014, %v1022
        %v1026 = vadd.f32 %v1010, %v1019
        %v1027 = vadd.f32 %v1012, %v1023
        %vm1028 = vcmp.gt.f32.partialorder %v1026, 0.0
        %vm1029 = vcmp.gt.f32.partialorder %v1027, 0.0
        %v1030 = vmul.f32 %v1026, 0.01
        %v1031 = vmul.f32 %v1027, 0.01
        %v1032 = vsel %vm1028, %v1026, %v1030
        %v1033 = vsel %vm1029, %v1027, %v1031
        %v1034 = vld [vmem:[%s9] sm:$0x3]
        %v1035 = vld [vmem:[%s11] sm:$0xf]
        %v1036 = vld [vmem:[%s8] sm:$0x3]
        %v1038 = vlaneseq
        %v1039 = vshrl.u32 %v1038, 7
        %v1040 = vsub.s32 0, %v1039
        %v1041 = vrot.slane %v1036, %v1040
        %v1042 = vlaneseq
        %v1043 = vshrl.u32 %v1042, 7
        %v1044 = vsub.s32 1, %v1043
        %v1045 = vrot.slane %v1036, %v1044
        %v1046 = vcombine.low %v1041, %v1045
        %v1048 = vunpack.c.l.s4 1983009808
        %v1049 = vunpack.c.0.s8 %v1048
        %v1050 = vlaneseq
        %v1051 = vshrl.u32 %v1050, 7
        %v1052 = vsub.s32 %v1049, %v1051
        %v1053 = vrot.slane %v1046, %v1052
        %v1055 = vadd.f32 %v1035, %v1053
        %s1056 = scalar_lea.vmem %s8, 2
        %v1057 = vld [vmem:[%s1056] sm:$0x3]
        %v1059 = vlaneseq
        %v1060 = vshrl.u32 %v1059, 7
        %v1061 = vsub.s32 0, %v1060
        %v1062 = vrot.slane %v1057, %v1061
        %v1063 = vlaneseq
        %v1064 = vshrl.u32 %v1063, 7
        %v1065 = vsub.s32 1, %v1064
        %v1066 = vrot.slane %v1057, %v1065
        %v1067 = vcombine.low %v1062, %v1066
        %v1069 = vunpack.c.l.s4 1983009808
        %v1070 = vunpack.c.0.s8 %v1069
        %v1071 = vlaneseq
        %v1072 = vshrl.u32 %v1071, 7
        %v1073 = vsub.s32 %v1070, %v1072
        %v1074 = vrot.slane %v1067, %v1073
        %v1076 = vadd.f32 %v444, %v1074
        %s1077 = scalar_lea.vmem %s8, 4
        %v1078 = vld [vmem:[%s1077] sm:$0x3]
        %v1080 = vlaneseq
        %v1081 = vshrl.u32 %v1080, 7
        %v1082 = vsub.s32 0, %v1081
        %v1083 = vrot.slane %v1078, %v1082
        %v1084 = vlaneseq
        %v1085 = vshrl.u32 %v1084, 7
        %v1086 = vsub.s32 1, %v1085
        %v1087 = vrot.slane %v1078, %v1086
        %v1088 = vcombine.low %v1083, %v1087
        %v1090 = vunpack.c.l.s4 1983009808
        %v1091 = vunpack.c.0.s8 %v1090
        %v1092 = vlaneseq
        %v1093 = vshrl.u32 %v1092, 7
        %v1094 = vsub.s32 %v1091, %v1093
        %v1095 = vrot.slane %v1088, %v1094
        %v1097 = vadd.f32 %v442, %v1095
        %v1099 = vlaneseq
        %v1100 = vshrl.u32 %v1099, 7
        %v1101 = vsub.s32 0, %v1100
        %v1102 = vrot.slane %v1034, %v1101
        %v1103 = vlaneseq
        %v1104 = vshrl.u32 %v1103, 7
        %v1105 = vsub.s32 1, %v1104
        %v1106 = vrot.slane %v1034, %v1105
        %v1107 = vcombine.low %v1102, %v1106
        %v1109 = vunpack.c.l.s4 1983009808
        %v1110 = vunpack.c.0.s8 %v1109
        %v1111 = vlaneseq
        %v1112 = vshrl.u32 %v1111, 7
        %v1113 = vsub.s32 %v1110, %v1112
        %v1114 = vrot.slane %v1107, %v1113
        %v1116 = vmul.f32 %v1055, %v1114
        %v1119 = vunpack.c.l.s4 1983009808
        %v1120 = vunpack.c.0.s8 %v1119
        %v1121 = vlaneseq
        %v1122 = vshrl.u32 %v1121, 7
        %v1123 = vsub.s32 %v1120, %v1122
        %v1124 = vrot.slane %v1116, %v1123
        %v1125 = vcombine.high %v1124, %v1124
        %vm1128 = vcmask 1041408
        %v1129 = vsel %vm1128, %v1124, 0.0
        %v1130 = vsel %vm1128, %v1125, 0.0
        %v1131 = vadd.f32 %v1129, %v1130
        %1132 = vadd.xlane.f32.xlu0 %v1131
        %v1133 = vpop.xlane.xlu0 %1132
        %v1134 = vmul.f32 %v1076, %v1114
        %v1137 = vunpack.c.l.s4 1983009808
        %v1138 = vunpack.c.0.s8 %v1137
        %v1139 = vlaneseq
        %v1140 = vshrl.u32 %v1139, 7
        %v1141 = vsub.s32 %v1138, %v1140
        %v1142 = vrot.slane %v1134, %v1141
        %v1143 = vcombine.high %v1142, %v1142
        %v1146 = vsel %vm1128, %v1142, 0.0
        %v1147 = vsel %vm1128, %v1143, 0.0
        %v1148 = vadd.f32 %v1146, %v1147
        %1149 = vadd.xlane.f32.xlu0 %v1148
        %v1150 = vpop.xlane.xlu0 %1149
        %v1151 = vmul.f32 %v1097, %v1114
        %v1154 = vunpack.c.l.s4 1983009808
        %v1155 = vunpack.c.0.s8 %v1154
        %v1156 = vlaneseq
        %v1157 = vshrl.u32 %v1156, 7
        %v1158 = vsub.s32 %v1155, %v1157
        %v1159 = vrot.slane %v1151, %v1158
        %v1160 = vcombine.high %v1159, %v1159
        %v1163 = vsel %vm1128, %v1159, 0.0
        %v1164 = vsel %vm1128, %v1160, 0.0
        %v1165 = vadd.f32 %v1163, %v1164
        %1166 = vadd.xlane.f32.xlu0 %v1165
        %v1167 = vpop.xlane.xlu0 %1166
        %v1168 = vmax.f32 %v1133, %v1150
        %v1169 = vmax.f32 %v1168, %v1167
        %v1170 = vsub.f32 %v1133, %v1169
        %v1171 = vmul.f32 %v1170, 1.442695
        %v1172 = vpow.pop %v1171
        %v1173 = vsub.f32 %v1150, %v1169
        %v1174 = vmul.f32 %v1173, 1.442695
        %v1175 = vpow.pop %v1174
        %v1176 = vsub.f32 %v1167, %v1169
        %v1177 = vmul.f32 %v1176, 1.442695
        %v1178 = vpow.pop %v1177
        %v1179 = vadd.f32 %v1172, %v1175
        %v1180 = vadd.f32 %v1179, %v1178
        %v1181 = vrcp.pop %v1180
        %v1182 = vmul.f32 1.0, %v1181
        %v1183 = vmul.f32 %v1172, %v1182
        %v1186 = vunpack.c.l.s4 1983009808
        %v1187 = vunpack.c.0.s8 %v1186
        %v1188 = vlaneseq
        %v1189 = vshrl.u32 %v1188, 7
        %v1190 = vsub.s32 %v1187, %v1189
        %v1191 = vrot.slane %v1055, %v1190
        %v1192 = vcombine.high %v1191, %v1191
        %v1195 = vmul.f32 %v1183, %v1191
        %v1196 = vmul.f32 %v1183, %v1192
        %v1197 = vmul.f32 %v1175, %v1182
        %v1200 = vunpack.c.l.s4 1983009808
        %v1201 = vunpack.c.0.s8 %v1200
        %v1202 = vlaneseq
        %v1203 = vshrl.u32 %v1202, 7
        %v1204 = vsub.s32 %v1201, %v1203
        %v1205 = vrot.slane %v1076, %v1204
        %v1206 = vcombine.high %v1205, %v1205
        %v1209 = vmul.f32 %v1197, %v1205
        %v1210 = vmul.f32 %v1197, %v1206
        %v1211 = vadd.f32 %v1195, %v1209
        %v1212 = vadd.f32 %v1196, %v1210
        %v1213 = vmul.f32 %v1178, %v1182
        %v1216 = vunpack.c.l.s4 1983009808
        %v1217 = vunpack.c.0.s8 %v1216
        %v1218 = vlaneseq
        %v1219 = vshrl.u32 %v1218, 7
        %v1220 = vsub.s32 %v1217, %v1219
        %v1221 = vrot.slane %v1097, %v1220
        %v1222 = vcombine.high %v1221, %v1221
        %v1225 = vmul.f32 %v1213, %v1221
        %v1226 = vmul.f32 %v1213, %v1222
        %v1227 = vadd.f32 %v1211, %v1225
        %v1228 = vadd.f32 %v1212, %v1226
        %v1229 = vpack.c.bf16 %v1032, %v1032
        %v1230 = vpack.c.bf16 %v1033, %v1033
        %v1231 = vld [vmem:[#allocation7] sm:$0xff]
        %v1232 = vld [vmem:[#allocation7 + $0x8] sm:$0xff]
        %v1233 = vld [vmem:[#allocation7 + $0x10] sm:$0xff]
        %v1234 = vld [vmem:[#allocation7 + $0x18] sm:$0xff]
        %v1235 = vld [vmem:[#allocation7 + $0x20] sm:$0xff]
        %v1236 = vld [vmem:[#allocation7 + $0x28] sm:$0xff]
        %v1237 = vld [vmem:[#allocation7 + $0x30] sm:$0xff]
        %v1238 = vld [vmem:[#allocation7 + $0x38] sm:$0xff]
        %v1239 = vld [vmem:[#allocation7 + $0x40] sm:$0xff]
        %v1240 = vld [vmem:[#allocation7 + $0x48] sm:$0xff]
        %v1241 = vld [vmem:[#allocation7 + $0x50] sm:$0xff]
        %v1242 = vld [vmem:[#allocation7 + $0x58] sm:$0xff]
        %v1243 = vld [vmem:[#allocation7 + $0x60] sm:$0xff]
        %v1244 = vld [vmem:[#allocation7 + $0x68] sm:$0xff]
        %v1245 = vld [vmem:[#allocation7 + $0x70] sm:$0xff]
        %v1246 = vld [vmem:[#allocation7 + $0x78] sm:$0xff]
        %v1247 = vld [vmem:[#allocation7 + $0x80] sm:$0xff]
        %v1248 = vld [vmem:[#allocation7 + $0x88] sm:$0xff]
        %v1249 = vld [vmem:[#allocation7 + $0x90] sm:$0xff]
        %v1250 = vld [vmem:[#allocation7 + $0x98] sm:$0xff]
        %v1251 = vld [vmem:[#allocation7 + $0xa0] sm:$0xff]
        %v1252 = vld [vmem:[#allocation7 + $0xa8] sm:$0xff]
        %v1253 = vld [vmem:[#allocation7 + $0xb0] sm:$0xff]
        %v1254 = vld [vmem:[#allocation7 + $0xb8] sm:$0xff]
        %v1255 = vld [vmem:[#allocation7 + $0xc0] sm:$0xff]
        %v1256 = vld [vmem:[#allocation7 + $0xc8] sm:$0xff]
        %v1257 = vld [vmem:[#allocation7 + $0xd0] sm:$0xff]
        %v1258 = vld [vmem:[#allocation7 + $0xd8] sm:$0xff]
        %v1259 = vld [vmem:[#allocation7 + $0xe0] sm:$0xff]
        %v1260 = vld [vmem:[#allocation7 + $0xe8] sm:$0xff]
        %v1261 = vld [vmem:[#allocation7 + $0xf0] sm:$0xff]
        %v1262 = vld [vmem:[#allocation7 + $0xf8] sm:$0xff]
        %v1295 = vunpack.c.l.b16 %v1231
        %v1296 = vunpack.c.h.b16 %v1231
        %v1297 = vunpack.c.l.b16 %v1232
        %v1298 = vunpack.c.h.b16 %v1232
        %v1299 = vunpack.c.l.b16 %v1233
        %v1300 = vunpack.c.h.b16 %v1233
        %v1301 = vunpack.c.l.b16 %v1234
        %v1302 = vunpack.c.h.b16 %v1234
        %v1303 = vunpack.c.l.b16 %v1235
        %v1304 = vunpack.c.h.b16 %v1235
        %v1305 = vunpack.c.l.b16 %v1236
        %v1306 = vunpack.c.h.b16 %v1236
        %v1307 = vunpack.c.l.b16 %v1237
        %v1308 = vunpack.c.h.b16 %v1237
        %v1309 = vunpack.c.l.b16 %v1238
        %v1310 = vunpack.c.h.b16 %v1238
        %v1311 = vunpack.c.l.b16 %v1239
        %v1312 = vunpack.c.h.b16 %v1239
        %v1313 = vunpack.c.l.b16 %v1240
        %v1314 = vunpack.c.h.b16 %v1240
        %v1315 = vunpack.c.l.b16 %v1241
        %v1316 = vunpack.c.h.b16 %v1241
        %v1317 = vunpack.c.l.b16 %v1242
        %v1318 = vunpack.c.h.b16 %v1242
        %v1319 = vunpack.c.l.b16 %v1243
        %v1320 = vunpack.c.h.b16 %v1243
        %v1321 = vunpack.c.l.b16 %v1244
        %v1322 = vunpack.c.h.b16 %v1244
        %v1323 = vunpack.c.l.b16 %v1245
        %v1324 = vunpack.c.h.b16 %v1245
        %v1325 = vunpack.c.l.b16 %v1246
        %v1326 = vunpack.c.h.b16 %v1246
        %v1327 = vunpack.c.l.b16 %v1247
        %v1328 = vunpack.c.h.b16 %v1247
        %v1329 = vunpack.c.l.b16 %v1248
        %v1330 = vunpack.c.h.b16 %v1248
        %v1331 = vunpack.c.l.b16 %v1249
        %v1332 = vunpack.c.h.b16 %v1249
        %v1333 = vunpack.c.l.b16 %v1250
        %v1334 = vunpack.c.h.b16 %v1250
        %v1335 = vunpack.c.l.b16 %v1251
        %v1336 = vunpack.c.h.b16 %v1251
        %v1337 = vunpack.c.l.b16 %v1252
        %v1338 = vunpack.c.h.b16 %v1252
        %v1339 = vunpack.c.l.b16 %v1253
        %v1340 = vunpack.c.h.b16 %v1253
        %v1341 = vunpack.c.l.b16 %v1254
        %v1342 = vunpack.c.h.b16 %v1254
        %v1343 = vunpack.c.l.b16 %v1255
        %v1344 = vunpack.c.h.b16 %v1255
        %v1345 = vunpack.c.l.b16 %v1256
        %v1346 = vunpack.c.h.b16 %v1256
        %v1347 = vunpack.c.l.b16 %v1257
        %v1348 = vunpack.c.h.b16 %v1257
        %v1349 = vunpack.c.l.b16 %v1258
        %v1350 = vunpack.c.h.b16 %v1258
        %v1351 = vunpack.c.l.b16 %v1259
        %v1352 = vunpack.c.h.b16 %v1259
        %v1353 = vunpack.c.l.b16 %v1260
        %v1354 = vunpack.c.h.b16 %v1260
        %v1355 = vunpack.c.l.b16 %v1261
        %v1356 = vunpack.c.h.b16 %v1261
        %v1357 = vunpack.c.l.b16 %v1262
        %v1358 = vunpack.c.h.b16 %v1262
        %v1359 = vpack.c.b16 %v1297, %v1295
        %v1360 = vpack.c.b16 %v1298, %v1296
        %v1361 = vpack.c.b16 %v1301, %v1299
        %v1362 = vpack.c.b16 %v1302, %v1300
        %v1363 = vpack.c.b16 %v1305, %v1303
        %v1364 = vpack.c.b16 %v1306, %v1304
        %v1365 = vpack.c.b16 %v1309, %v1307
        %v1366 = vpack.c.b16 %v1310, %v1308
        %v1367 = vpack.c.b16 %v1313, %v1311
        %v1368 = vpack.c.b16 %v1314, %v1312
        %v1369 = vpack.c.b16 %v1317, %v1315
        %v1370 = vpack.c.b16 %v1318, %v1316
        %v1371 = vpack.c.b16 %v1321, %v1319
        %v1372 = vpack.c.b16 %v1322, %v1320
        %v1373 = vpack.c.b16 %v1325, %v1323
        %v1374 = vpack.c.b16 %v1326, %v1324
        %v1375 = vpack.c.b16 %v1329, %v1327
        %v1376 = vpack.c.b16 %v1330, %v1328
        %v1377 = vpack.c.b16 %v1333, %v1331
        %v1378 = vpack.c.b16 %v1334, %v1332
        %v1379 = vpack.c.b16 %v1337, %v1335
        %v1380 = vpack.c.b16 %v1338, %v1336
        %v1381 = vpack.c.b16 %v1341, %v1339
        %v1382 = vpack.c.b16 %v1342, %v1340
        %v1383 = vpack.c.b16 %v1345, %v1343
        %v1384 = vpack.c.b16 %v1346, %v1344
        %v1385 = vpack.c.b16 %v1349, %v1347
        %v1386 = vpack.c.b16 %v1350, %v1348
        %v1387 = vpack.c.b16 %v1353, %v1351
        %v1388 = vpack.c.b16 %v1354, %v1352
        %v1389 = vpack.c.b16 %v1357, %v1355
        %v1390 = vpack.c.b16 %v1358, %v1356
        %1423 = vmatprep.subr.bf16.mxu0 %v1374
        %1424 = vmatpush1.bf16.msra.mxu0 %v1373
        %1425 = vmatprep.subr.bf16.mxu0 %v1372
        %1426 = vmatpush1.bf16.msra.mxu0 %v1371
        %1427 = vmatprep.subr.bf16.mxu0 %v1370
        %1428 = vmatpush1.bf16.msra.mxu0 %v1369
        %1429 = vmatprep.subr.bf16.mxu0 %v1368
        %1430 = vmatpush1.bf16.msra.mxu0 %v1367
        %1431 = vmatprep.subr.bf16.mxu0 %v1366
        %1432 = vmatpush1.bf16.msra.mxu0 %v1365
        %1433 = vmatprep.subr.bf16.mxu0 %v1364
        %1434 = vmatpush1.bf16.msra.mxu0 %v1363
        %1435 = vmatprep.subr.bf16.mxu0 %v1362
        %1436 = vmatpush1.bf16.msra.mxu0 %v1361
        %1437 = vmatprep.subr.bf16.mxu0 %v1360
        %1438 = vmatpush1.bf16.msra.mxu0 %v1359
        %1439 = vmatprep.subr.bf16.mxu0 %v1390
        %1440 = vmatpush2.bf16.msra.mxu0 %v1389
        %1441 = vmatprep.subr.bf16.mxu0 %v1388
        %1442 = vmatpush2.bf16.msra.mxu0 %v1387
        %1443 = vmatprep.subr.bf16.mxu0 %v1386
        %1444 = vmatpush2.bf16.msra.mxu0 %v1385
        %1445 = vmatprep.subr.bf16.mxu0 %v1384
        %1446 = vmatpush2.bf16.msra.mxu0 %v1383
        %1447 = vmatprep.subr.bf16.mxu0 %v1382
        %1448 = vmatpush2.bf16.msra.mxu0 %v1381
        %1449 = vmatprep.subr.bf16.mxu0 %v1380
        %1450 = vmatpush2.bf16.msra.mxu0 %v1379
        %1451 = vmatprep.subr.bf16.mxu0 %v1378
        %1452 = vmatpush2.bf16.msra.mxu0 %v1377
        %1453 = vmatprep.subr.bf16.mxu0 %v1376
        %1454 = vmatpush2.bf16.msra.mxu0 %v1375
        %1455 = vmatprep.mubr.bf16.mxu0 %v1230
        %1456 = vmatmul.mubr.bf16.gmra.mxu0 %v1229
        %v1457 = vpop.f32.mrf.mxu0
        %v1458 = vadd.f32 0.0, %v1457
        %v1459 = vpop.f32.mrf.mxu0
        %v1460 = vadd.f32 0.0, %v1459
        %v1461 = vpop.f32.mrf.mxu0
        %v1462 = vpop.f32.mrf.mxu0
        %1463 = vdwg.mxu0
        %v1464 = vadd.f32 %v1227, %v1458
        %v1465 = vadd.f32 %v1228, %v1460
        %v1466 = vld [vmem:[%s7] sm:$0x3]
        %v1468 = vlaneseq
        %v1469 = vshrl.u32 %v1468, 7
        %v1470 = vsub.s32 0, %v1469
        %v1471 = vrot.slane %v1466, %v1470
        %v1472 = vlaneseq
        %v1473 = vshrl.u32 %v1472, 7
        %v1474 = vsub.s32 1, %v1473
        %v1475 = vrot.slane %v1466, %v1474
        %v1478 = vadd.f32 %v1464, %v1471
        %v1479 = vadd.f32 %v1465, %v1475
        %1480 = vst [vmem:[%s11] sm:$0xf] %v444
        %v1481 = vld [vmem:[%s441] sm:$0xf]
        %1482 = vst [vmem:[%s443] sm:$0xf] %v1481
        %v1485 = vcombine.low %v1478, %v1479
        %v1487 = vunpack.c.l.s4 1983009808
        %v1488 = vunpack.c.0.s8 %v1487
        %v1489 = vlaneseq
        %v1490 = vshrl.u32 %v1489, 7
        %v1491 = vsub.s32 %v1488, %v1490
        %v1492 = vrot.slane %v1485, %v1491
        %1494 = vst [vmem:[%s441] sm:$0xf] %v1492
        %s1495 = scalar_lea.vmem %s11, 20
        %v1496 = vld [vmem:[%s1495] sm:$0xf]
        %s1497 = scalar_lea.vmem %s11, 16
        %v1498 = vld [vmem:[%s1497] sm:$0xf]
        %v1501 = vunpack.c.l.s4 1983009808
        %v1502 = vunpack.c.0.s8 %v1501
        %v1503 = vlaneseq
        %v1504 = vshrl.u32 %v1503, 7
        %v1505 = vsub.s32 %v1502, %v1504
        %v1506 = vrot.slane %v1496, %v1505
        %v1507 = vcombine.high %v1506, %v1506
        %v1512 = vunpack.c.l.s4 1983009808
        %v1513 = vunpack.c.0.s8 %v1512
        %v1514 = vlaneseq
        %v1515 = vshrl.u32 %v1514, 7
        %v1516 = vsub.s32 %v1513, %v1515
        %v1517 = vrot.slane %v1498, %v1516
        %v1518 = vcombine.high %v1517, %v1517
        %v1521 = vpack.c.bf16 %v1478, %v1478
        %v1522 = vpack.c.bf16 %v1479, %v1479
        %v1523 = vpack.c.bf16 %v1506, %v1506
        %v1524 = vpack.c.bf16 %v1507, %v1507
        %v1525 = vpack.c.bf16 %v1517, %v1517
        %v1526 = vpack.c.bf16 %v1518, %v1518
        %v1527 = vld [vmem:[#allocation5] sm:$0xff]
        %v1528 = vld [vmem:[#allocation5 + $0x8] sm:$0xff]
        %v1529 = vld [vmem:[#allocation5 + $0x10] sm:$0xff]
        %v1530 = vld [vmem:[#allocation5 + $0x18] sm:$0xff]
        %v1531 = vld [vmem:[#allocation5 + $0x20] sm:$0xff]
        %v1532 = vld [vmem:[#allocation5 + $0x28] sm:$0xff]
        %v1533 = vld [vmem:[#allocation5 + $0x30] sm:$0xff]
        %v1534 = vld [vmem:[#allocation5 + $0x38] sm:$0xff]
        %v1535 = vld [vmem:[#allocation5 + $0x40] sm:$0xff]
        %v1536 = vld [vmem:[#allocation5 + $0x48] sm:$0xff]
        %v1537 = vld [vmem:[#allocation5 + $0x50] sm:$0xff]
        %v1538 = vld [vmem:[#allocation5 + $0x58] sm:$0xff]
        %v1539 = vld [vmem:[#allocation5 + $0x60] sm:$0xff]
        %v1540 = vld [vmem:[#allocation5 + $0x68] sm:$0xff]
        %v1541 = vld [vmem:[#allocation5 + $0x70] sm:$0xff]
        %v1542 = vld [vmem:[#allocation5 + $0x78] sm:$0xff]
        %v1543 = vld [vmem:[#allocation5 + $0x80] sm:$0xff]
        %v1544 = vld [vmem:[#allocation5 + $0x88] sm:$0xff]
        %v1545 = vld [vmem:[#allocation5 + $0x90] sm:$0xff]
        %v1546 = vld [vmem:[#allocation5 + $0x98] sm:$0xff]
        %v1547 = vld [vmem:[#allocation5 + $0xa0] sm:$0xff]
        %v1548 = vld [vmem:[#allocation5 + $0xa8] sm:$0xff]
        %v1549 = vld [vmem:[#allocation5 + $0xb0] sm:$0xff]
        %v1550 = vld [vmem:[#allocation5 + $0xb8] sm:$0xff]
        %v1551 = vld [vmem:[#allocation5 + $0xc0] sm:$0xff]
        %v1552 = vld [vmem:[#allocation5 + $0xc8] sm:$0xff]
        %v1553 = vld [vmem:[#allocation5 + $0xd0] sm:$0xff]
        %v1554 = vld [vmem:[#allocation5 + $0xd8] sm:$0xff]
        %v1555 = vld [vmem:[#allocation5 + $0xe0] sm:$0xff]
        %v1556 = vld [vmem:[#allocation5 + $0xe8] sm:$0xff]
        %v1557 = vld [vmem:[#allocation5 + $0xf0] sm:$0xff]
        %v1558 = vld [vmem:[#allocation5 + $0xf8] sm:$0xff]
        %v1559 = vld [vmem:[#allocation5 + $0x100] sm:$0xff]
        %v1560 = vld [vmem:[#allocation5 + $0x108] sm:$0xff]
        %v1561 = vld [vmem:[#allocation5 + $0x110] sm:$0xff]
        %v1562 = vld [vmem:[#allocation5 + $0x118] sm:$0xff]
        %v1563 = vld [vmem:[#allocation5 + $0x120] sm:$0xff]
        %v1564 = vld [vmem:[#allocation5 + $0x128] sm:$0xff]
        %v1565 = vld [vmem:[#allocation5 + $0x130] sm:$0xff]
        %v1566 = vld [vmem:[#allocation5 + $0x138] sm:$0xff]
        %v1567 = vld [vmem:[#allocation5 + $0x140] sm:$0xff]
        %v1568 = vld [vmem:[#allocation5 + $0x148] sm:$0xff]
        %v1569 = vld [vmem:[#allocation5 + $0x150] sm:$0xff]
        %v1570 = vld [vmem:[#allocation5 + $0x158] sm:$0xff]
        %v1571 = vld [vmem:[#allocation5 + $0x160] sm:$0xff]
        %v1572 = vld [vmem:[#allocation5 + $0x168] sm:$0xff]
        %v1573 = vld [vmem:[#allocation5 + $0x170] sm:$0xff]
        %v1574 = vld [vmem:[#allocation5 + $0x178] sm:$0xff]
        %v1575 = vld [vmem:[#allocation5 + $0x180] sm:$0xff]
        %v1576 = vld [vmem:[#allocation5 + $0x188] sm:$0xff]
        %v1577 = vld [vmem:[#allocation5 + $0x190] sm:$0xff]
        %v1578 = vld [vmem:[#allocation5 + $0x198] sm:$0xff]
        %v1579 = vld [vmem:[#allocation5 + $0x1a0] sm:$0xff]
        %v1580 = vld [vmem:[#allocation5 + $0x1a8] sm:$0xff]
        %v1581 = vld [vmem:[#allocation5 + $0x1b0] sm:$0xff]
        %v1582 = vld [vmem:[#allocation5 + $0x1b8] sm:$0xff]
        %v1583 = vld [vmem:[#allocation5 + $0x1c0] sm:$0xff]
        %v1584 = vld [vmem:[#allocation5 + $0x1c8] sm:$0xff]
        %v1585 = vld [vmem:[#allocation5 + $0x1d0] sm:$0xff]
        %v1586 = vld [vmem:[#allocation5 + $0x1d8] sm:$0xff]
        %v1587 = vld [vmem:[#allocation5 + $0x1e0] sm:$0xff]
        %v1588 = vld [vmem:[#allocation5 + $0x1e8] sm:$0xff]
        %v1589 = vld [vmem:[#allocation5 + $0x1f0] sm:$0xff]
        %v1590 = vld [vmem:[#allocation5 + $0x1f8] sm:$0xff]
        %v1591 = vld [vmem:[#allocation5 + $0x200] sm:$0xff]
        %v1592 = vld [vmem:[#allocation5 + $0x208] sm:$0xff]
        %v1593 = vld [vmem:[#allocation5 + $0x210] sm:$0xff]
        %v1594 = vld [vmem:[#allocation5 + $0x218] sm:$0xff]
        %v1595 = vld [vmem:[#allocation5 + $0x220] sm:$0xff]
        %v1596 = vld [vmem:[#allocation5 + $0x228] sm:$0xff]
        %v1597 = vld [vmem:[#allocation5 + $0x230] sm:$0xff]
        %v1598 = vld [vmem:[#allocation5 + $0x238] sm:$0xff]
        %v1599 = vld [vmem:[#allocation5 + $0x240] sm:$0xff]
        %v1600 = vld [vmem:[#allocation5 + $0x248] sm:$0xff]
        %v1601 = vld [vmem:[#allocation5 + $0x250] sm:$0xff]
        %v1602 = vld [vmem:[#allocation5 + $0x258] sm:$0xff]
        %v1603 = vld [vmem:[#allocation5 + $0x260] sm:$0xff]
        %v1604 = vld [vmem:[#allocation5 + $0x268] sm:$0xff]
        %v1605 = vld [vmem:[#allocation5 + $0x270] sm:$0xff]
        %v1606 = vld [vmem:[#allocation5 + $0x278] sm:$0xff]
        %v1607 = vld [vmem:[#allocation5 + $0x280] sm:$0xff]
        %v1608 = vld [vmem:[#allocation5 + $0x288] sm:$0xff]
        %v1609 = vld [vmem:[#allocation5 + $0x290] sm:$0xff]
        %v1610 = vld [vmem:[#allocation5 + $0x298] sm:$0xff]
        %v1611 = vld [vmem:[#allocation5 + $0x2a0] sm:$0xff]
        %v1612 = vld [vmem:[#allocation5 + $0x2a8] sm:$0xff]
        %v1613 = vld [vmem:[#allocation5 + $0x2b0] sm:$0xff]
        %v1614 = vld [vmem:[#allocation5 + $0x2b8] sm:$0xff]
        %v1615 = vld [vmem:[#allocation5 + $0x2c0] sm:$0xff]
        %v1616 = vld [vmem:[#allocation5 + $0x2c8] sm:$0xff]
        %v1617 = vld [vmem:[#allocation5 + $0x2d0] sm:$0xff]
        %v1618 = vld [vmem:[#allocation5 + $0x2d8] sm:$0xff]
        %v1619 = vld [vmem:[#allocation5 + $0x2e0] sm:$0xff]
        %v1620 = vld [vmem:[#allocation5 + $0x2e8] sm:$0xff]
        %v1621 = vld [vmem:[#allocation5 + $0x2f0] sm:$0xff]
        %v1622 = vld [vmem:[#allocation5 + $0x2f8] sm:$0xff]
        %s1623 = scalar_lea.vmem %s6, 2
        %v1624 = vld [vmem:[%s1623] sm:$0x3]
        %v1626 = vlaneseq
        %v1627 = vshrl.u32 %v1626, 7
        %v1628 = vsub.s32 0, %v1627
        %v1629 = vrot.slane %v1624, %v1628
        %v1630 = vlaneseq
        %v1631 = vshrl.u32 %v1630, 7
        %v1632 = vsub.s32 1, %v1631
        %v1633 = vrot.slane %v1624, %v1632
        %v1732 = vunpack.c.l.b16 %v1527
        %v1733 = vunpack.c.h.b16 %v1527
        %v1734 = vunpack.c.l.b16 %v1528
        %v1735 = vunpack.c.h.b16 %v1528
        %v1736 = vunpack.c.l.b16 %v1529
        %v1737 = vunpack.c.h.b16 %v1529
        %v1738 = vunpack.c.l.b16 %v1530
        %v1739 = vunpack.c.h.b16 %v1530
        %v1740 = vunpack.c.l.b16 %v1531
        %v1741 = vunpack.c.h.b16 %v1531
        %v1742 = vunpack.c.l.b16 %v1532
        %v1743 = vunpack.c.h.b16 %v1532
        %v1744 = vunpack.c.l.b16 %v1533
        %v1745 = vunpack.c.h.b16 %v1533
        %v1746 = vunpack.c.l.b16 %v1534
        %v1747 = vunpack.c.h.b16 %v1534
        %v1748 = vunpack.c.l.b16 %v1535
        %v1749 = vunpack.c.h.b16 %v1535
        %v1750 = vunpack.c.l.b16 %v1536
        %v1751 = vunpack.c.h.b16 %v1536
        %v1752 = vunpack.c.l.b16 %v1537
        %v1753 = vunpack.c.h.b16 %v1537
        %v1754 = vunpack.c.l.b16 %v1538
        %v1755 = vunpack.c.h.b16 %v1538
        %v1756 = vunpack.c.l.b16 %v1539
        %v1757 = vunpack.c.h.b16 %v1539
        %v1758 = vunpack.c.l.b16 %v1540
        %v1759 = vunpack.c.h.b16 %v1540
        %v1760 = vunpack.c.l.b16 %v1541
        %v1761 = vunpack.c.h.b16 %v1541
        %v1762 = vunpack.c.l.b16 %v1542
        %v1763 = vunpack.c.h.b16 %v1542
        %v1764 = vunpack.c.l.b16 %v1543
        %v1765 = vunpack.c.h.b16 %v1543
        %v1766 = vunpack.c.l.b16 %v1544
        %v1767 = vunpack.c.h.b16 %v1544
        %v1768 = vunpack.c.l.b16 %v1545
        %v1769 = vunpack.c.h.b16 %v1545
        %v1770 = vunpack.c.l.b16 %v1546
        %v1771 = vunpack.c.h.b16 %v1546
        %v1772 = vunpack.c.l.b16 %v1547
        %v1773 = vunpack.c.h.b16 %v1547
        %v1774 = vunpack.c.l.b16 %v1548
        %v1775 = vunpack.c.h.b16 %v1548
        %v1776 = vunpack.c.l.b16 %v1549
        %v1777 = vunpack.c.h.b16 %v1549
        %v1778 = vunpack.c.l.b16 %v1550
        %v1779 = vunpack.c.h.b16 %v1550
        %v1780 = vunpack.c.l.b16 %v1551
        %v1781 = vunpack.c.h.b16 %v1551
        %v1782 = vunpack.c.l.b16 %v1552
        %v1783 = vunpack.c.h.b16 %v1552
        %v1784 = vunpack.c.l.b16 %v1553
        %v1785 = vunpack.c.h.b16 %v1553
        %v1786 = vunpack.c.l.b16 %v1554
        %v1787 = vunpack.c.h.b16 %v1554
        %v1788 = vunpack.c.l.b16 %v1555
        %v1789 = vunpack.c.h.b16 %v1555
        %v1790 = vunpack.c.l.b16 %v1556
        %v1791 = vunpack.c.h.b16 %v1556
        %v1792 = vunpack.c.l.b16 %v1557
        %v1793 = vunpack.c.h.b16 %v1557
        %v1794 = vunpack.c.l.b16 %v1558
        %v1795 = vunpack.c.h.b16 %v1558
        %v1796 = vunpack.c.l.b16 %v1559
        %v1797 = vunpack.c.h.b16 %v1559
        %v1798 = vunpack.c.l.b16 %v1560
        %v1799 = vunpack.c.h.b16 %v1560
        %v1800 = vunpack.c.l.b16 %v1561
        %v1801 = vunpack.c.h.b16 %v1561
        %v1802 = vunpack.c.l.b16 %v1562
        %v1803 = vunpack.c.h.b16 %v1562
        %v1804 = vunpack.c.l.b16 %v1563
        %v1805 = vunpack.c.h.b16 %v1563
        %v1806 = vunpack.c.l.b16 %v1564
        %v1807 = vunpack.c.h.b16 %v1564
        %v1808 = vunpack.c.l.b16 %v1565
        %v1809 = vunpack.c.h.b16 %v1565
        %v1810 = vunpack.c.l.b16 %v1566
        %v1811 = vunpack.c.h.b16 %v1566
        %v1812 = vunpack.c.l.b16 %v1567
        %v1813 = vunpack.c.h.b16 %v1567
        %v1814 = vunpack.c.l.b16 %v1568
        %v1815 = vunpack.c.h.b16 %v1568
        %v1816 = vunpack.c.l.b16 %v1569
        %v1817 = vunpack.c.h.b16 %v1569
        %v1818 = vunpack.c.l.b16 %v1570
        %v1819 = vunpack.c.h.b16 %v1570
        %v1820 = vunpack.c.l.b16 %v1571
        %v1821 = vunpack.c.h.b16 %v1571
        %v1822 = vunpack.c.l.b16 %v1572
        %v1823 = vunpack.c.h.b16 %v1572
        %v1824 = vunpack.c.l.b16 %v1573
        %v1825 = vunpack.c.h.b16 %v1573
        %v1826 = vunpack.c.l.b16 %v1574
        %v1827 = vunpack.c.h.b16 %v1574
        %v1828 = vunpack.c.l.b16 %v1575
        %v1829 = vunpack.c.h.b16 %v1575
        %v1830 = vunpack.c.l.b16 %v1576
        %v1831 = vunpack.c.h.b16 %v1576
        %v1832 = vunpack.c.l.b16 %v1577
        %v1833 = vunpack.c.h.b16 %v1577
        %v1834 = vunpack.c.l.b16 %v1578
        %v1835 = vunpack.c.h.b16 %v1578
        %v1836 = vunpack.c.l.b16 %v1579
        %v1837 = vunpack.c.h.b16 %v1579
        %v1838 = vunpack.c.l.b16 %v1580
        %v1839 = vunpack.c.h.b16 %v1580
        %v1840 = vunpack.c.l.b16 %v1581
        %v1841 = vunpack.c.h.b16 %v1581
        %v1842 = vunpack.c.l.b16 %v1582
        %v1843 = vunpack.c.h.b16 %v1582
        %v1844 = vunpack.c.l.b16 %v1583
        %v1845 = vunpack.c.h.b16 %v1583
        %v1846 = vunpack.c.l.b16 %v1584
        %v1847 = vunpack.c.h.b16 %v1584
        %v1848 = vunpack.c.l.b16 %v1585
        %v1849 = vunpack.c.h.b16 %v1585
        %v1850 = vunpack.c.l.b16 %v1586
        %v1851 = vunpack.c.h.b16 %v1586
        %v1852 = vunpack.c.l.b16 %v1587
        %v1853 = vunpack.c.h.b16 %v1587
        %v1854 = vunpack.c.l.b16 %v1588
        %v1855 = vunpack.c.h.b16 %v1588
        %v1856 = vunpack.c.l.b16 %v1589
        %v1857 = vunpack.c.h.b16 %v1589
        %v1858 = vunpack.c.l.b16 %v1590
        %v1859 = vunpack.c.h.b16 %v1590
        %v1860 = vunpack.c.l.b16 %v1591
        %v1861 = vunpack.c.h.b16 %v1591
        %v1862 = vunpack.c.l.b16 %v1592
        %v1863 = vunpack.c.h.b16 %v1592
        %v1864 = vunpack.c.l.b16 %v1593
        %v1865 = vunpack.c.h.b16 %v1593
        %v1866 = vunpack.c.l.b16 %v1594
        %v1867 = vunpack.c.h.b16 %v1594
        %v1868 = vunpack.c.l.b16 %v1595
        %v1869 = vunpack.c.h.b16 %v1595
        %v1870 = vunpack.c.l.b16 %v1596
        %v1871 = vunpack.c.h.b16 %v1596
        %v1872 = vunpack.c.l.b16 %v1597
        %v1873 = vunpack.c.h.b16 %v1597
        %v1874 = vunpack.c.l.b16 %v1598
        %v1875 = vunpack.c.h.b16 %v1598
        %v1876 = vunpack.c.l.b16 %v1599
        %v1877 = vunpack.c.h.b16 %v1599
        %v1878 = vunpack.c.l.b16 %v1600
        %v1879 = vunpack.c.h.b16 %v1600
        %v1880 = vunpack.c.l.b16 %v1601
        %v1881 = vunpack.c.h.b16 %v1601
        %v1882 = vunpack.c.l.b16 %v1602
        %v1883 = vunpack.c.h.b16 %v1602
        %v1884 = vunpack.c.l.b16 %v1603
        %v1885 = vunpack.c.h.b16 %v1603
        %v1886 = vunpack.c.l.b16 %v1604
        %v1887 = vunpack.c.h.b16 %v1604
        %v1888 = vunpack.c.l.b16 %v1605
        %v1889 = vunpack.c.h.b16 %v1605
        %v1890 = vunpack.c.l.b16 %v1606
        %v1891 = vunpack.c.h.b16 %v1606
        %v1892 = vunpack.c.l.b16 %v1607
        %v1893 = vunpack.c.h.b16 %v1607
        %v1894 = vunpack.c.l.b16 %v1608
        %v1895 = vunpack.c.h.b16 %v1608
        %v1896 = vunpack.c.l.b16 %v1609
        %v1897 = vunpack.c.h.b16 %v1609
        %v1898 = vunpack.c.l.b16 %v1610
        %v1899 = vunpack.c.h.b16 %v1610
        %v1900 = vunpack.c.l.b16 %v1611
        %v1901 = vunpack.c.h.b16 %v1611
        %v1902 = vunpack.c.l.b16 %v1612
        %v1903 = vunpack.c.h.b16 %v1612
        %v1904 = vunpack.c.l.b16 %v1613
        %v1905 = vunpack.c.h.b16 %v1613
        %v1906 = vunpack.c.l.b16 %v1614
        %v1907 = vunpack.c.h.b16 %v1614
        %v1908 = vunpack.c.l.b16 %v1615
        %v1909 = vunpack.c.h.b16 %v1615
        %v1910 = vunpack.c.l.b16 %v1616
        %v1911 = vunpack.c.h.b16 %v1616
        %v1912 = vunpack.c.l.b16 %v1617
        %v1913 = vunpack.c.h.b16 %v1617
        %v1914 = vunpack.c.l.b16 %v1618
        %v1915 = vunpack.c.h.b16 %v1618
        %v1916 = vunpack.c.l.b16 %v1619
        %v1917 = vunpack.c.h.b16 %v1619
        %v1918 = vunpack.c.l.b16 %v1620
        %v1919 = vunpack.c.h.b16 %v1620
        %v1920 = vunpack.c.l.b16 %v1621
        %v1921 = vunpack.c.h.b16 %v1621
        %v1922 = vunpack.c.l.b16 %v1622
        %v1923 = vunpack.c.h.b16 %v1622
        %v1924 = vpack.c.b16 %v1734, %v1732
        %v1925 = vpack.c.b16 %v1735, %v1733
        %v1926 = vpack.c.b16 %v1738, %v1736
        %v1927 = vpack.c.b16 %v1739, %v1737
        %v1928 = vpack.c.b16 %v1742, %v1740
        %v1929 = vpack.c.b16 %v1743, %v1741
        %v1930 = vpack.c.b16 %v1746, %v1744
        %v1931 = vpack.c.b16 %v1747, %v1745
        %v1932 = vpack.c.b16 %v1750, %v1748
        %v1933 = vpack.c.b16 %v1751, %v1749
        %v1934 = vpack.c.b16 %v1754, %v1752
        %v1935 = vpack.c.b16 %v1755, %v1753
        %v1936 = vpack.c.b16 %v1758, %v1756
        %v1937 = vpack.c.b16 %v1759, %v1757
        %v1938 = vpack.c.b16 %v1762, %v1760
        %v1939 = vpack.c.b16 %v1763, %v1761
        %v1940 = vpack.c.b16 %v1766, %v1764
        %v1941 = vpack.c.b16 %v1767, %v1765
        %v1942 = vpack.c.b16 %v1770, %v1768
        %v1943 = vpack.c.b16 %v1771, %v1769
        %v1944 = vpack.c.b16 %v1774, %v1772
        %v1945 = vpack.c.b16 %v1775, %v1773
        %v1946 = vpack.c.b16 %v1778, %v1776
        %v1947 = vpack.c.b16 %v1779, %v1777
        %v1948 = vpack.c.b16 %v1782, %v1780
        %v1949 = vpack.c.b16 %v1783, %v1781
        %v1950 = vpack.c.b16 %v1786, %v1784
        %v1951 = vpack.c.b16 %v1787, %v1785
        %v1952 = vpack.c.b16 %v1790, %v1788
        %v1953 = vpack.c.b16 %v1791, %v1789
        %v1954 = vpack.c.b16 %v1794, %v1792
        %v1955 = vpack.c.b16 %v1795, %v1793
        %v1956 = vpack.c.b16 %v1798, %v1796
        %v1957 = vpack.c.b16 %v1799, %v1797
        %v1958 = vpack.c.b16 %v1802, %v1800
        %v1959 = vpack.c.b16 %v1803, %v1801
        %v1960 = vpack.c.b16 %v1806, %v1804
        %v1961 = vpack.c.b16 %v1807, %v1805
        %v1962 = vpack.c.b16 %v1810, %v1808
        %v1963 = vpack.c.b16 %v1811, %v1809
        %v1964 = vpack.c.b16 %v1814, %v1812
        %v1965 = vpack.c.b16 %v1815, %v1813
        %v1966 = vpack.c.b16 %v1818, %v1816
        %v1967 = vpack.c.b16 %v1819, %v1817
        %v1968 = vpack.c.b16 %v1822, %v1820
        %v1969 = vpack.c.b16 %v1823, %v1821
        %v1970 = vpack.c.b16 %v1826, %v1824
        %v1971 = vpack.c.b16 %v1827, %v1825
        %v1972 = vpack.c.b16 %v1830, %v1828
        %v1973 = vpack.c.b16 %v1831, %v1829
        %v1974 = vpack.c.b16 %v1834, %v1832
        %v1975 = vpack.c.b16 %v1835, %v1833
        %v1976 = vpack.c.b16 %v1838, %v1836
        %v1977 = vpack.c.b16 %v1839, %v1837
        %v1978 = vpack.c.b16 %v1842, %v1840
        %v1979 = vpack.c.b16 %v1843, %v1841
        %v1980 = vpack.c.b16 %v1846, %v1844
        %v1981 = vpack.c.b16 %v1847, %v1845
        %v1982 = vpack.c.b16 %v1850, %v1848
        %v1983 = vpack.c.b16 %v1851, %v1849
        %v1984 = vpack.c.b16 %v1854, %v1852
        %v1985 = vpack.c.b16 %v1855, %v1853
        %v1986 = vpack.c.b16 %v1858, %v1856
        %v1987 = vpack.c.b16 %v1859, %v1857
        %v1988 = vpack.c.b16 %v1862, %v1860
        %v1989 = vpack.c.b16 %v1863, %v1861
        %v1990 = vpack.c.b16 %v1866, %v1864
        %v1991 = vpack.c.b16 %v1867, %v1865
        %v1992 = vpack.c.b16 %v1870, %v1868
        %v1993 = vpack.c.b16 %v1871, %v1869
        %v1994 = vpack.c.b16 %v1874, %v1872
        %v1995 = vpack.c.b16 %v1875, %v1873
        %v1996 = vpack.c.b16 %v1878, %v1876
        %v1997 = vpack.c.b16 %v1879, %v1877
        %v1998 = vpack.c.b16 %v1882, %v1880
        %v1999 = vpack.c.b16 %v1883, %v1881
        %v2000 = vpack.c.b16 %v1886, %v1884
        %v2001 = vpack.c.b16 %v1887, %v1885
        %v2002 = vpack.c.b16 %v1890, %v1888
        %v2003 = vpack.c.b16 %v1891, %v1889
        %v2004 = vpack.c.b16 %v1894, %v1892
        %v2005 = vpack.c.b16 %v1895, %v1893
        %v2006 = vpack.c.b16 %v1898, %v1896
        %v2007 = vpack.c.b16 %v1899, %v1897
        %v2008 = vpack.c.b16 %v1902, %v1900
        %v2009 = vpack.c.b16 %v1903, %v1901
        %v2010 = vpack.c.b16 %v1906, %v1904
        %v2011 = vpack.c.b16 %v1907, %v1905
        %v2012 = vpack.c.b16 %v1910, %v1908
        %v2013 = vpack.c.b16 %v1911, %v1909
        %v2014 = vpack.c.b16 %v1914, %v1912
        %v2015 = vpack.c.b16 %v1915, %v1913
        %v2016 = vpack.c.b16 %v1918, %v1916
        %v2017 = vpack.c.b16 %v1919, %v1917
        %v2018 = vpack.c.b16 %v1922, %v1920
        %v2019 = vpack.c.b16 %v1923, %v1921
        %2116 = vmatprep.subr.bf16.mxu0 %v1939
        %2117 = vmatpush1.bf16.msra.mxu0 %v1938
        %2118 = vmatprep.subr.bf16.mxu0 %v1937
        %2119 = vmatpush1.bf16.msra.mxu0 %v1936
        %2120 = vmatprep.subr.bf16.mxu0 %v1935
        %2121 = vmatpush1.bf16.msra.mxu0 %v1934
        %2122 = vmatprep.subr.bf16.mxu0 %v1933
        %2123 = vmatpush1.bf16.msra.mxu0 %v1932
        %2124 = vmatprep.subr.bf16.mxu0 %v1931
        %2125 = vmatpush1.bf16.msra.mxu0 %v1930
        %2126 = vmatprep.subr.bf16.mxu0 %v1929
        %2127 = vmatpush1.bf16.msra.mxu0 %v1928
        %2128 = vmatprep.subr.bf16.mxu0 %v1927
        %2129 = vmatpush1.bf16.msra.mxu0 %v1926
        %2130 = vmatprep.subr.bf16.mxu0 %v1925
        %2131 = vmatpush1.bf16.msra.mxu0 %v1924
        %2132 = vmatprep.subr.bf16.mxu0 %v1955
        %2133 = vmatpush2.bf16.msra.mxu0 %v1954
        %2134 = vmatprep.subr.bf16.mxu0 %v1953
        %2135 = vmatpush2.bf16.msra.mxu0 %v1952
        %2136 = vmatprep.subr.bf16.mxu0 %v1951
        %2137 = vmatpush2.bf16.msra.mxu0 %v1950
        %2138 = vmatprep.subr.bf16.mxu0 %v1949
        %2139 = vmatpush2.bf16.msra.mxu0 %v1948
        %2140 = vmatprep.subr.bf16.mxu0 %v1947
        %2141 = vmatpush2.bf16.msra.mxu0 %v1946
        %2142 = vmatprep.subr.bf16.mxu0 %v1945
        %2143 = vmatpush2.bf16.msra.mxu0 %v1944
        %2144 = vmatprep.subr.bf16.mxu0 %v1943
        %2145 = vmatpush2.bf16.msra.mxu0 %v1942
        %2146 = vmatprep.subr.bf16.mxu0 %v1941
        %2147 = vmatpush2.bf16.msra.mxu0 %v1940
        %2148 = vmatprep.mubr.bf16.mxu0 %v1522
        %2149 = vmatmul.mubr.bf16.gmra.mxu0 %v1521
        %v2150 = vpop.f32.mrf.mxu0
        %v2151 = vadd.f32 %v1629, %v2150
        %v2152 = vpop.f32.mrf.mxu0
        %v2153 = vadd.f32 %v1633, %v2152
        %v2154 = vpop.f32.mrf.mxu0
        %v2155 = vpop.f32.mrf.mxu0
        %2156 = vdwg.mxu0
        %2157 = vmatprep.subr.bf16.mxu0 %v1971
        %2158 = vmatpush1.bf16.msra.mxu0 %v1970
        %2159 = vmatprep.subr.bf16.mxu0 %v1969
        %2160 = vmatpush1.bf16.msra.mxu0 %v1968
        %2161 = vmatprep.subr.bf16.mxu0 %v1967
        %2162 = vmatpush1.bf16.msra.mxu0 %v1966
        %2163 = vmatprep.subr.bf16.mxu0 %v1965
        %2164 = vmatpush1.bf16.msra.mxu0 %v1964
        %2165 = vmatprep.subr.bf16.mxu0 %v1963
        %2166 = vmatpush1.bf16.msra.mxu0 %v1962
        %2167 = vmatprep.subr.bf16.mxu0 %v1961
        %2168 = vmatpush1.bf16.msra.mxu0 %v1960
        %2169 = vmatprep.subr.bf16.mxu0 %v1959
        %2170 = vmatpush1.bf16.msra.mxu0 %v1958
        %2171 = vmatprep.subr.bf16.mxu0 %v1957
        %2172 = vmatpush1.bf16.msra.mxu0 %v1956
        %2173 = vmatprep.subr.bf16.mxu0 %v1987
        %2174 = vmatpush2.bf16.msra.mxu0 %v1986
        %2175 = vmatprep.subr.bf16.mxu0 %v1985
        %2176 = vmatpush2.bf16.msra.mxu0 %v1984
        %2177 = vmatprep.subr.bf16.mxu0 %v1983
        %2178 = vmatpush2.bf16.msra.mxu0 %v1982
        %2179 = vmatprep.subr.bf16.mxu0 %v1981
        %2180 = vmatpush2.bf16.msra.mxu0 %v1980
        %2181 = vmatprep.subr.bf16.mxu0 %v1979
        %2182 = vmatpush2.bf16.msra.mxu0 %v1978
        %2183 = vmatprep.subr.bf16.mxu0 %v1977
        %2184 = vmatpush2.bf16.msra.mxu0 %v1976
        %2185 = vmatprep.subr.bf16.mxu0 %v1975
        %2186 = vmatpush2.bf16.msra.mxu0 %v1974
        %2187 = vmatprep.subr.bf16.mxu0 %v1973
        %2188 = vmatpush2.bf16.msra.mxu0 %v1972
        %2189 = vmatprep.mubr.bf16.mxu0 %v1524
        %2190 = vmatmul.mubr.bf16.gmra.mxu0 %v1523
        %v2191 = vpop.f32.mrf.mxu0
        %v2192 = vadd.f32 %v2151, %v2191
        %v2193 = vpop.f32.mrf.mxu0
        %v2194 = vadd.f32 %v2153, %v2193
        %v2195 = vpop.f32.mrf.mxu0
        %v2196 = vpop.f32.mrf.mxu0
        %2197 = vdwg.mxu0
        %2198 = vmatprep.subr.bf16.mxu0 %v2003
        %2199 = vmatpush1.bf16.msra.mxu0 %v2002
        %2200 = vmatprep.subr.bf16.mxu0 %v2001
        %2201 = vmatpush1.bf16.msra.mxu0 %v2000
        %2202 = vmatprep.subr.bf16.mxu0 %v1999
        %2203 = vmatpush1.bf16.msra.mxu0 %v1998
        %2204 = vmatprep.subr.bf16.mxu0 %v1997
        %2205 = vmatpush1.bf16.msra.mxu0 %v1996
        %2206 = vmatprep.subr.bf16.mxu0 %v1995
        %2207 = vmatpush1.bf16.msra.mxu0 %v1994
        %2208 = vmatprep.subr.bf16.mxu0 %v1993
        %2209 = vmatpush1.bf16.msra.mxu0 %v1992
        %2210 = vmatprep.subr.bf16.mxu0 %v1991
        %2211 = vmatpush1.bf16.msra.mxu0 %v1990
        %2212 = vmatprep.subr.bf16.mxu0 %v1989
        %2213 = vmatpush1.bf16.msra.mxu0 %v1988
        %2214 = vmatprep.subr.bf16.mxu0 %v2019
        %2215 = vmatpush2.bf16.msra.mxu0 %v2018
        %2216 = vmatprep.subr.bf16.mxu0 %v2017
        %2217 = vmatpush2.bf16.msra.mxu0 %v2016
        %2218 = vmatprep.subr.bf16.mxu0 %v2015
        %2219 = vmatpush2.bf16.msra.mxu0 %v2014
        %2220 = vmatprep.subr.bf16.mxu0 %v2013
        %2221 = vmatpush2.bf16.msra.mxu0 %v2012
        %2222 = vmatprep.subr.bf16.mxu0 %v2011
        %2223 = vmatpush2.bf16.msra.mxu0 %v2010
        %2224 = vmatprep.subr.bf16.mxu0 %v2009
        %2225 = vmatpush2.bf16.msra.mxu0 %v2008
        %2226 = vmatprep.subr.bf16.mxu0 %v2007
        %2227 = vmatpush2.bf16.msra.mxu0 %v2006
        %2228 = vmatprep.subr.bf16.mxu0 %v2005
        %2229 = vmatpush2.bf16.msra.mxu0 %v2004
        %2230 = vmatprep.mubr.bf16.mxu0 %v1526
        %2231 = vmatmul.mubr.bf16.gmra.mxu0 %v1525
        %v2232 = vpop.f32.mrf.mxu0
        %v2233 = vadd.f32 %v2192, %v2232
        %v2234 = vpop.f32.mrf.mxu0
        %v2235 = vadd.f32 %v2194, %v2234
        %v2236 = vpop.f32.mrf.mxu0
        %v2237 = vpop.f32.mrf.mxu0
        %2238 = vdwg.mxu0
        %vm2239 = vcmp.gt.f32.partialorder %v2233, 0.0
        %vm2240 = vcmp.gt.f32.partialorder %v2235, 0.0
        %v2241 = vmul.f32 %v2233, 0.01
        %v2242 = vmul.f32 %v2235, 0.01
        %v2243 = vsel %vm2239, %v2233, %v2241
        %v2244 = vsel %vm2240, %v2235, %v2242
        %s2245 = scalar_lea.vmem %s9, 2
        %v2246 = vld [vmem:[%s2245] sm:$0x3]
        %s2247 = scalar_lea.vmem %s11, 12
        %v2248 = vld [vmem:[%s2247] sm:$0xf]
        %s2249 = scalar_lea.vmem %s8, 6
        %v2250 = vld [vmem:[%s2249] sm:$0x3]
        %v2252 = vlaneseq
        %v2253 = vshrl.u32 %v2252, 7
        %v2254 = vsub.s32 0, %v2253
        %v2255 = vrot.slane %v2250, %v2254
        %v2256 = vlaneseq
        %v2257 = vshrl.u32 %v2256, 7
        %v2258 = vsub.s32 1, %v2257
        %v2259 = vrot.slane %v2250, %v2258
        %v2260 = vcombine.low %v2255, %v2259
        %v2262 = vunpack.c.l.s4 1983009808
        %v2263 = vunpack.c.0.s8 %v2262
        %v2264 = vlaneseq
        %v2265 = vshrl.u32 %v2264, 7
        %v2266 = vsub.s32 %v2263, %v2265
        %v2267 = vrot.slane %v2260, %v2266
        %v2269 = vadd.f32 %v2248, %v2267
        %s2270 = scalar_lea.vmem %s8, 8
        %v2271 = vld [vmem:[%s2270] sm:$0x3]
        %v2273 = vlaneseq
        %v2274 = vshrl.u32 %v2273, 7
        %v2275 = vsub.s32 0, %v2274
        %v2276 = vrot.slane %v2271, %v2275
        %v2277 = vlaneseq
        %v2278 = vshrl.u32 %v2277, 7
        %v2279 = vsub.s32 1, %v2278
        %v2280 = vrot.slane %v2271, %v2279
        %v2281 = vcombine.low %v2276, %v2280
        %v2283 = vunpack.c.l.s4 1983009808
        %v2284 = vunpack.c.0.s8 %v2283
        %v2285 = vlaneseq
        %v2286 = vshrl.u32 %v2285, 7
        %v2287 = vsub.s32 %v2284, %v2286
        %v2288 = vrot.slane %v2281, %v2287
        %v2290 = vadd.f32 %v1498, %v2288
        %s2291 = scalar_lea.vmem %s8, 10
        %v2292 = vld [vmem:[%s2291] sm:$0x3]
        %v2294 = vlaneseq
        %v2295 = vshrl.u32 %v2294, 7
        %v2296 = vsub.s32 0, %v2295
        %v2297 = vrot.slane %v2292, %v2296
        %v2298 = vlaneseq
        %v2299 = vshrl.u32 %v2298, 7
        %v2300 = vsub.s32 1, %v2299
        %v2301 = vrot.slane %v2292, %v2300
        %v2302 = vcombine.low %v2297, %v2301
        %v2304 = vunpack.c.l.s4 1983009808
        %v2305 = vunpack.c.0.s8 %v2304
        %v2306 = vlaneseq
        %v2307 = vshrl.u32 %v2306, 7
        %v2308 = vsub.s32 %v2305, %v2307
        %v2309 = vrot.slane %v2302, %v2308
        %v2311 = vadd.f32 %v1496, %v2309
        %v2313 = vlaneseq
        %v2314 = vshrl.u32 %v2313, 7
        %v2315 = vsub.s32 0, %v2314
        %v2316 = vrot.slane %v2246, %v2315
        %v2317 = vlaneseq
        %v2318 = vshrl.u32 %v2317, 7
        %v2319 = vsub.s32 1, %v2318
        %v2320 = vrot.slane %v2246, %v2319
        %v2321 = vcombine.low %v2316, %v2320
        %v2323 = vunpack.c.l.s4 1983009808
        %v2324 = vunpack.c.0.s8 %v2323
        %v2325 = vlaneseq
        %v2326 = vshrl.u32 %v2325, 7
        %v2327 = vsub.s32 %v2324, %v2326
        %v2328 = vrot.slane %v2321, %v2327
        %v2330 = vmul.f32 %v2269, %v2328
        %v2333 = vunpack.c.l.s4 1983009808
        %v2334 = vunpack.c.0.s8 %v2333
        %v2335 = vlaneseq
        %v2336 = vshrl.u32 %v2335, 7
        %v2337 = vsub.s32 %v2334, %v2336
        %v2338 = vrot.slane %v2330, %v2337
        %v2339 = vcombine.high %v2338, %v2338
        %v2342 = vsel %vm1128, %v2338, 0.0
        %v2343 = vsel %vm1128, %v2339, 0.0
        %v2344 = vadd.f32 %v2342, %v2343
        %2345 = vadd.xlane.f32.xlu0 %v2344
        %v2346 = vpop.xlane.xlu0 %2345
        %v2347 = vmul.f32 %v2290, %v2328
        %v2350 = vunpack.c.l.s4 1983009808
        %v2351 = vunpack.c.0.s8 %v2350
        %v2352 = vlaneseq
        %v2353 = vshrl.u32 %v2352, 7
        %v2354 = vsub.s32 %v2351, %v2353
        %v2355 = vrot.slane %v2347, %v2354
        %v2356 = vcombine.high %v2355, %v2355
        %v2359 = vsel %vm1128, %v2355, 0.0
        %v2360 = vsel %vm1128, %v2356, 0.0
        %v2361 = vadd.f32 %v2359, %v2360
        %2362 = vadd.xlane.f32.xlu0 %v2361
        %v2363 = vpop.xlane.xlu0 %2362
        %v2364 = vmul.f32 %v2311, %v2328
        %v2367 = vunpack.c.l.s4 1983009808
        %v2368 = vunpack.c.0.s8 %v2367
        %v2369 = vlaneseq
        %v2370 = vshrl.u32 %v2369, 7
        %v2371 = vsub.s32 %v2368, %v2370
        %v2372 = vrot.slane %v2364, %v2371
        %v2373 = vcombine.high %v2372, %v2372
        %v2376 = vsel %vm1128, %v2372, 0.0
        %v2377 = vsel %vm1128, %v2373, 0.0
        %v2378 = vadd.f32 %v2376, %v2377
        %2379 = vadd.xlane.f32.xlu0 %v2378
        %v2380 = vpop.xlane.xlu0 %2379
        %v2381 = vmax.f32 %v2346, %v2363
        %v2382 = vmax.f32 %v2381, %v2380
        %v2383 = vsub.f32 %v2346, %v2382
        %v2384 = vmul.f32 %v2383, 1.442695
        %v2385 = vpow.pop %v2384
        %v2386 = vsub.f32 %v2363, %v2382
        %v2387 = vmul.f32 %v2386, 1.442695
        %v2388 = vpow.pop %v2387
        %v2389 = vsub.f32 %v2380, %v2382
        %v2390 = vmul.f32 %v2389, 1.442695
        %v2391 = vpow.pop %v2390
        %v2392 = vadd.f32 %v2385, %v2388
        %v2393 = vadd.f32 %v2392, %v2391
        %v2394 = vrcp.pop %v2393
        %v2395 = vmul.f32 1.0, %v2394
        %v2396 = vmul.f32 %v2385, %v2395
        %v2399 = vunpack.c.l.s4 1983009808
        %v2400 = vunpack.c.0.s8 %v2399
        %v2401 = vlaneseq
        %v2402 = vshrl.u32 %v2401, 7
        %v2403 = vsub.s32 %v2400, %v2402
        %v2404 = vrot.slane %v2269, %v2403
        %v2405 = vcombine.high %v2404, %v2404
        %v2408 = vmul.f32 %v2396, %v2404
        %v2409 = vmul.f32 %v2396, %v2405
        %v2410 = vmul.f32 %v2388, %v2395
        %v2413 = vunpack.c.l.s4 1983009808
        %v2414 = vunpack.c.0.s8 %v2413
        %v2415 = vlaneseq
        %v2416 = vshrl.u32 %v2415, 7
        %v2417 = vsub.s32 %v2414, %v2416
        %v2418 = vrot.slane %v2290, %v2417
        %v2419 = vcombine.high %v2418, %v2418
        %v2422 = vmul.f32 %v2410, %v2418
        %v2423 = vmul.f32 %v2410, %v2419
        %v2424 = vadd.f32 %v2408, %v2422
        %v2425 = vadd.f32 %v2409, %v2423
        %v2426 = vmul.f32 %v2391, %v2395
        %v2429 = vunpack.c.l.s4 1983009808
        %v2430 = vunpack.c.0.s8 %v2429
        %v2431 = vlaneseq
        %v2432 = vshrl.u32 %v2431, 7
        %v2433 = vsub.s32 %v2430, %v2432
        %v2434 = vrot.slane %v2311, %v2433
        %v2435 = vcombine.high %v2434, %v2434
        %v2438 = vmul.f32 %v2426, %v2434
        %v2439 = vmul.f32 %v2426, %v2435
        %v2440 = vadd.f32 %v2424, %v2438
        %v2441 = vadd.f32 %v2425, %v2439
        %v2442 = vpack.c.bf16 %v2243, %v2243
        %v2443 = vpack.c.bf16 %v2244, %v2244
        %s2444 = scalar_lea.vmem [#allocation7], 256
        %v2445 = vld [vmem:[%s2444] sm:$0xff]
        %v2446 = vld [vmem:[%s2444 + $0x8] sm:$0xff]
        %v2447 = vld [vmem:[%s2444 + $0x10] sm:$0xff]
        %v2448 = vld [vmem:[%s2444 + $0x18] sm:$0xff]
        %v2449 = vld [vmem:[%s2444 + $0x20] sm:$0xff]
        %v2450 = vld [vmem:[%s2444 + $0x28] sm:$0xff]
        %v2451 = vld [vmem:[%s2444 + $0x30] sm:$0xff]
        %v2452 = vld [vmem:[%s2444 + $0x38] sm:$0xff]
        %v2453 = vld [vmem:[%s2444 + $0x40] sm:$0xff]
        %v2454 = vld [vmem:[%s2444 + $0x48] sm:$0xff]
        %v2455 = vld [vmem:[%s2444 + $0x50] sm:$0xff]
        %v2456 = vld [vmem:[%s2444 + $0x58] sm:$0xff]
        %v2457 = vld [vmem:[%s2444 + $0x60] sm:$0xff]
        %v2458 = vld [vmem:[%s2444 + $0x68] sm:$0xff]
        %v2459 = vld [vmem:[%s2444 + $0x70] sm:$0xff]
        %v2460 = vld [vmem:[%s2444 + $0x78] sm:$0xff]
        %v2461 = vld [vmem:[%s2444 + $0x80] sm:$0xff]
        %v2462 = vld [vmem:[%s2444 + $0x88] sm:$0xff]
        %v2463 = vld [vmem:[%s2444 + $0x90] sm:$0xff]
        %v2464 = vld [vmem:[%s2444 + $0x98] sm:$0xff]
        %v2465 = vld [vmem:[%s2444 + $0xa0] sm:$0xff]
        %v2466 = vld [vmem:[%s2444 + $0xa8] sm:$0xff]
        %v2467 = vld [vmem:[%s2444 + $0xb0] sm:$0xff]
        %v2468 = vld [vmem:[%s2444 + $0xb8] sm:$0xff]
        %v2469 = vld [vmem:[%s2444 + $0xc0] sm:$0xff]
        %v2470 = vld [vmem:[%s2444 + $0xc8] sm:$0xff]
        %v2471 = vld [vmem:[%s2444 + $0xd0] sm:$0xff]
        %v2472 = vld [vmem:[%s2444 + $0xd8] sm:$0xff]
        %v2473 = vld [vmem:[%s2444 + $0xe0] sm:$0xff]
        %v2474 = vld [vmem:[%s2444 + $0xe8] sm:$0xff]
        %v2475 = vld [vmem:[%s2444 + $0xf0] sm:$0xff]
        %v2476 = vld [vmem:[%s2444 + $0xf8] sm:$0xff]
        %v2509 = vunpack.c.l.b16 %v2445
        %v2510 = vunpack.c.h.b16 %v2445
        %v2511 = vunpack.c.l.b16 %v2446
        %v2512 = vunpack.c.h.b16 %v2446
        %v2513 = vunpack.c.l.b16 %v2447
        %v2514 = vunpack.c.h.b16 %v2447
        %v2515 = vunpack.c.l.b16 %v2448
        %v2516 = vunpack.c.h.b16 %v2448
        %v2517 = vunpack.c.l.b16 %v2449
        %v2518 = vunpack.c.h.b16 %v2449
        %v2519 = vunpack.c.l.b16 %v2450
        %v2520 = vunpack.c.h.b16 %v2450
        %v2521 = vunpack.c.l.b16 %v2451
        %v2522 = vunpack.c.h.b16 %v2451
        %v2523 = vunpack.c.l.b16 %v2452
        %v2524 = vunpack.c.h.b16 %v2452
        %v2525 = vunpack.c.l.b16 %v2453
        %v2526 = vunpack.c.h.b16 %v2453
        %v2527 = vunpack.c.l.b16 %v2454
        %v2528 = vunpack.c.h.b16 %v2454
        %v2529 = vunpack.c.l.b16 %v2455
        %v2530 = vunpack.c.h.b16 %v2455
        %v2531 = vunpack.c.l.b16 %v2456
        %v2532 = vunpack.c.h.b16 %v2456
        %v2533 = vunpack.c.l.b16 %v2457
        %v2534 = vunpack.c.h.b16 %v2457
        %v2535 = vunpack.c.l.b16 %v2458
        %v2536 = vunpack.c.h.b16 %v2458
        %v2537 = vunpack.c.l.b16 %v2459
        %v2538 = vunpack.c.h.b16 %v2459
        %v2539 = vunpack.c.l.b16 %v2460
        %v2540 = vunpack.c.h.b16 %v2460
        %v2541 = vunpack.c.l.b16 %v2461
        %v2542 = vunpack.c.h.b16 %v2461
        %v2543 = vunpack.c.l.b16 %v2462
        %v2544 = vunpack.c.h.b16 %v2462
        %v2545 = vunpack.c.l.b16 %v2463
        %v2546 = vunpack.c.h.b16 %v2463
        %v2547 = vunpack.c.l.b16 %v2464
        %v2548 = vunpack.c.h.b16 %v2464
        %v2549 = vunpack.c.l.b16 %v2465
        %v2550 = vunpack.c.h.b16 %v2465
        %v2551 = vunpack.c.l.b16 %v2466
        %v2552 = vunpack.c.h.b16 %v2466
        %v2553 = vunpack.c.l.b16 %v2467
        %v2554 = vunpack.c.h.b16 %v2467
        %v2555 = vunpack.c.l.b16 %v2468
        %v2556 = vunpack.c.h.b16 %v2468
        %v2557 = vunpack.c.l.b16 %v2469
        %v2558 = vunpack.c.h.b16 %v2469
        %v2559 = vunpack.c.l.b16 %v2470
        %v2560 = vunpack.c.h.b16 %v2470
        %v2561 = vunpack.c.l.b16 %v2471
        %v2562 = vunpack.c.h.b16 %v2471
        %v2563 = vunpack.c.l.b16 %v2472
        %v2564 = vunpack.c.h.b16 %v2472
        %v2565 = vunpack.c.l.b16 %v2473
        %v2566 = vunpack.c.h.b16 %v2473
        %v2567 = vunpack.c.l.b16 %v2474
        %v2568 = vunpack.c.h.b16 %v2474
        %v2569 = vunpack.c.l.b16 %v2475
        %v2570 = vunpack.c.h.b16 %v2475
        %v2571 = vunpack.c.l.b16 %v2476
        %v2572 = vunpack.c.h.b16 %v2476
        %v2573 = vpack.c.b16 %v2511, %v2509
        %v2574 = vpack.c.b16 %v2512, %v2510
        %v2575 = vpack.c.b16 %v2515, %v2513
        %v2576 = vpack.c.b16 %v2516, %v2514
        %v2577 = vpack.c.b16 %v2519, %v2517
        %v2578 = vpack.c.b16 %v2520, %v2518
        %v2579 = vpack.c.b16 %v2523, %v2521
        %v2580 = vpack.c.b16 %v2524, %v2522
        %v2581 = vpack.c.b16 %v2527, %v2525
        %v2582 = vpack.c.b16 %v2528, %v2526
        %v2583 = vpack.c.b16 %v2531, %v2529
        %v2584 = vpack.c.b16 %v2532, %v2530
        %v2585 = vpack.c.b16 %v2535, %v2533
        %v2586 = vpack.c.b16 %v2536, %v2534
        %v2587 = vpack.c.b16 %v2539, %v2537
        %v2588 = vpack.c.b16 %v2540, %v2538
        %v2589 = vpack.c.b16 %v2543, %v2541
        %v2590 = vpack.c.b16 %v2544, %v2542
        %v2591 = vpack.c.b16 %v2547, %v2545
        %v2592 = vpack.c.b16 %v2548, %v2546
        %v2593 = vpack.c.b16 %v2551, %v2549
        %v2594 = vpack.c.b16 %v2552, %v2550
        %v2595 = vpack.c.b16 %v2555, %v2553
        %v2596 = vpack.c.b16 %v2556, %v2554
        %v2597 = vpack.c.b16 %v2559, %v2557
        %v2598 = vpack.c.b16 %v2560, %v2558
        %v2599 = vpack.c.b16 %v2563, %v2561
        %v2600 = vpack.c.b16 %v2564, %v2562
        %v2601 = vpack.c.b16 %v2567, %v2565
        %v2602 = vpack.c.b16 %v2568, %v2566
        %v2603 = vpack.c.b16 %v2571, %v2569
        %v2604 = vpack.c.b16 %v2572, %v2570
        %2637 = vmatprep.subr.bf16.mxu0 %v2588
        %2638 = vmatpush1.bf16.msra.mxu0 %v2587
        %2639 = vmatprep.subr.bf16.mxu0 %v2586
        %2640 = vmatpush1.bf16.msra.mxu0 %v2585
        %2641 = vmatprep.subr.bf16.mxu0 %v2584
        %2642 = vmatpush1.bf16.msra.mxu0 %v2583
        %2643 = vmatprep.subr.bf16.mxu0 %v2582
        %2644 = vmatpush1.bf16.msra.mxu0 %v2581
        %2645 = vmatprep.subr.bf16.mxu0 %v2580
        %2646 = vmatpush1.bf16.msra.mxu0 %v2579
        %2647 = vmatprep.subr.bf16.mxu0 %v2578
        %2648 = vmatpush1.bf16.msra.mxu0 %v2577
        %2649 = vmatprep.subr.bf16.mxu0 %v2576
        %2650 = vmatpush1.bf16.msra.mxu0 %v2575
        %2651 = vmatprep.subr.bf16.mxu0 %v2574
        %2652 = vmatpush1.bf16.msra.mxu0 %v2573
        %2653 = vmatprep.subr.bf16.mxu0 %v2604
        %2654 = vmatpush2.bf16.msra.mxu0 %v2603
        %2655 = vmatprep.subr.bf16.mxu0 %v2602
        %2656 = vmatpush2.bf16.msra.mxu0 %v2601
        %2657 = vmatprep.subr.bf16.mxu0 %v2600
        %2658 = vmatpush2.bf16.msra.mxu0 %v2599
        %2659 = vmatprep.subr.bf16.mxu0 %v2598
        %2660 = vmatpush2.bf16.msra.mxu0 %v2597
        %2661 = vmatprep.subr.bf16.mxu0 %v2596
        %2662 = vmatpush2.bf16.msra.mxu0 %v2595
        %2663 = vmatprep.subr.bf16.mxu0 %v2594
        %2664 = vmatpush2.bf16.msra.mxu0 %v2593
        %2665 = vmatprep.subr.bf16.mxu0 %v2592
        %2666 = vmatpush2.bf16.msra.mxu0 %v2591
        %2667 = vmatprep.subr.bf16.mxu0 %v2590
        %2668 = vmatpush2.bf16.msra.mxu0 %v2589
        %2669 = vmatprep.mubr.bf16.mxu0 %v2443
        %2670 = vmatmul.mubr.bf16.gmra.mxu0 %v2442
        %v2671 = vpop.f32.mrf.mxu0
        %v2672 = vadd.f32 0.0, %v2671
        %v2673 = vpop.f32.mrf.mxu0
        %v2674 = vadd.f32 0.0, %v2673
        %v2675 = vpop.f32.mrf.mxu0
        %v2676 = vpop.f32.mrf.mxu0
        %2677 = vdwg.mxu0
        %v2678 = vadd.f32 %v2440, %v2672
        %v2679 = vadd.f32 %v2441, %v2674
        %s2680 = scalar_lea.vmem %s7, 2
        %v2681 = vld [vmem:[%s2680] sm:$0x3]
        %v2683 = vlaneseq
        %v2684 = vshrl.u32 %v2683, 7
        %v2685 = vsub.s32 0, %v2684
        %v2686 = vrot.slane %v2681, %v2685
        %v2687 = vlaneseq
        %v2688 = vshrl.u32 %v2687, 7
        %v2689 = vsub.s32 1, %v2688
        %v2690 = vrot.slane %v2681, %v2689
        %v2693 = vadd.f32 %v2678, %v2686
        %v2694 = vadd.f32 %v2679, %v2690
        %2695 = vst [vmem:[%s2247] sm:$0xf] %v1498
        %v2696 = vld [vmem:[%s1495] sm:$0xf]
        %2697 = vst [vmem:[%s1497] sm:$0xf] %v2696
        %v2700 = vcombine.low %v2693, %v2694
        %v2702 = vunpack.c.l.s4 1983009808
        %v2703 = vunpack.c.0.s8 %v2702
        %v2704 = vlaneseq
        %v2705 = vshrl.u32 %v2704, 7
        %v2706 = vsub.s32 %v2703, %v2705
        %v2707 = vrot.slane %v2700, %v2706
        %2709 = vst [vmem:[%s1495] sm:$0xf] %v2707
        %v2710 = vadd.f32 %v1478, %v2693
        %v2711 = vadd.f32 %v1479, %v2694
        %v2714 = vcombine.low %v2710, %v2711
        %v2716 = vunpack.c.l.s4 1983009808
        %v2717 = vunpack.c.0.s8 %v2716
        %v2718 = vlaneseq
        %v2719 = vshrl.u32 %v2718, 7
        %v2720 = vsub.s32 %v2717, %v2719
        %v2721 = vrot.slane %v2714, %v2720
        %2723 = vst [vmem:[%s417] sm:$0xf] %v2721
        %s2724 = sand.u32 %s251, 1
        %s2725 = scalar_lea.sflag [#allocation4], %s2724
        %s2726 = sand.u32 %s251, 1
        %s2727 = smul.addr %s2726, 4
        %s2728 = scalar_lea.vmem [#allocation8], %s2727
        // Predicated region
        $region77: #{encoder_forward_seq.1} parent=59 // pred_check
          %p2729 = pneg %p261
        $region78: #{encoder_forward_seq.1} parent=59 // pred_check_branch
          %2731 = sbr.rel (%p2729) target = $region80
        $region79: #{encoder_forward_seq.1} parent=59 // pred_region
          %s2733 = ssub.s32 64, 64
          %2734 = vsyncadd %s2725, %s2733
          %s2735 = smul.addr %s28, 2
          %s2736 = smul.addr %s2735, 32
          %s2737 = scalar_lea.hbm %s10, %s2736
          %s2739 = sshll.u32 %s2728, 4
          %s2740 = int_to_ptr.vmem [resolvable:$true] %s2739
          %2742 = dma.vmem_to_hbm [thread:$0]  %s2740, 64, %s2737, %s2725
        $region80: #{encoder_forward_seq.1} parent=59 // pred_fallthru
          _
        // Predicated region
        $region81: #{encoder_forward_seq.1} parent=59 // pred_check
          %p2743 = pneg %p282
        $region82: #{encoder_forward_seq.1} parent=59 // pred_check_branch
          %2745 = sbr.rel (%p2743) target = $region84
        $region83: #{encoder_forward_seq.1} parent=59 // pred_region
          _
        $region84: #{encoder_forward_seq.1} parent=59 // pred_fallthru
          _
        // Predicated region
        $region85: #{encoder_forward_seq.1} parent=59 // pred_check
          %p2746 = pneg %p282
        $region86: #{encoder_forward_seq.1} parent=59 // pred_check_branch
          %2748 = sbr.rel (%p2746) target = $region88
        $region87: #{encoder_forward_seq.1} parent=59 // pred_region
          _
        $region88: #{encoder_forward_seq.1} parent=59 // pred_fallthru
          _
      $region60: #{encoder_forward_seq.1} parent=5 // pred_fallthru
        _
      %p2749 = scmp.le.s32.totalorder 2, %s23
      // Predicated region
      $region89: #{encoder_forward_seq.1} parent=5 // pred_check
        %p2750 = pneg %p2749
      $region90: #{encoder_forward_seq.1} parent=5 // pred_check_branch
        %2752 = sbr.rel (%p2750) target = $region92
      $region91: #{encoder_forward_seq.1} parent=5 // pred_region
        %s2753 = ssub.s32 %s23, 2
        // Predicated region
        $region93: #{encoder_forward_seq.1} parent=91 // pred_check
          %p2754 = pneg %p267
        $region94: #{encoder_forward_seq.1} parent=91 // pred_check_branch
          %2756 = sbr.rel (%p2754) target = $region96
        $region95: #{encoder_forward_seq.1} parent=91 // pred_region
          %s2757 = sand.u32 %s252, 1
          %s2758 = scalar_lea.sflag [#allocation4], %s2757
          %s2759 = sand.u32 %s252, 1
          %s2760 = smul.addr %s2759, 4
          %s2761 = scalar_lea.vmem [#allocation8], %s2760
          %2762 = dma.done %s2758, 64
        $region96: #{encoder_forward_seq.1} parent=91 // pred_fallthru
          _
      $region92: #{encoder_forward_seq.1} parent=5 // pred_fallthru
        _
    $region6: #{encoder_forward_seq.1} parent=1 // loop_footer
      %s27 = sadd.s32 1, %s23
    $region7: #{encoder_forward_seq.1} parent=1 // loop_footer_branch
      %22 = sbr.rel target = $region3
    $region8: #{encoder_forward_seq.1} parent=1 // loop_exit
      _
    %2763 = vsyncpa [#allocation3], 1
    %s2764 = scalar_lea.sflag [#allocation3], 1
    %2765 = vsyncpa %s2764, 1
    %2766 = vsyncpa [#allocation6], 1
    %2767 = vsyncpa [#allocation4], 1
    %s2768 = scalar_lea.sflag [#allocation4], 1
    %2769 = vsyncpa %s2768, 1

</llo_original>
